<compile_context>
chip_gen: v7x
topology: tpu7x:2x2x1
jax: 0.10.0
libtpu: 0.0.40
codegen_flags: <defaults>
</compile_context>

<pallas_src>
import jax
import jax.numpy as jnp
from jax import lax
from jax.experimental import pallas as pl
from jax.experimental.pallas import tpu as pltpu


def _round_up(x, m):
    return (x + m - 1) // m * m


def nnlm_kernel(ids_ref, fused_ref, b_ref, o_ref):
    """Fused one-hot gather-matmul + bias + hardtanh + log_softmax for one batch tile.

    ids_ref   : (TB, C)    int32  token ids for this batch tile (pipelined input)
    fused_ref : (C*V, H)   f32    folded emb@W table (VMEM-resident across grid steps)
    b_ref     : (1, H)     f32    linear bias
    o_ref     : (TB, H)    f32    log-probs (H on the lane axis, lane-dense store)
    """
    ids = ids_ref[...]                                   # (TB, C) int32
    TB, C = ids.shape
    CV, H = fused_ref.shape
    V = CV // C

    # Concatenated one-hot built directly in (TB, C*V) lane layout: one lane iota,
    # C static compares (C is tiny -> unrolled VPU filler under the single matmul).
    lane = lax.broadcasted_iota(jnp.int32, (TB, CV), 1)  # (TB, C*V)
    onehot = jnp.zeros((TB, CV), jnp.float32)
    for c in range(C):
        onehot = onehot + (lane == (ids[:, c:c + 1] + c * V)).astype(jnp.float32)

    # Single MXU matmul: (TB, C*V) x (C*V, H).  One-hot entries are exact 0/1, fused
    # table stays f32, HIGHEST precision -> near-f32 result, f32 accumulation.
    acc = jnp.dot(onehot, fused_ref[...],
                  preferred_element_type=jnp.float32,
                  precision=jax.lax.Precision.HIGHEST)   # (TB, H) f32

    h = acc + b_ref[...]                                 # bias in f32
    h = jnp.clip(h, -1.0, 1.0)                           # F.hardtanh default [-1, 1]

    # Numerically stable log_softmax over the full (untiled) lane axis H.
    m = jnp.max(h, axis=-1, keepdims=True)
    shifted = h - m
    lse = jnp.log(jnp.sum(jnp.exp(shifted), axis=-1, keepdims=True))
    o_ref[...] = (shifted - lse).astype(o_ref.dtype)


def nnlm_forward(token_ids, emb_table, w_lin, b_lin, *, block_b=512):
    """token_ids: (B, context) int32 -> (B, intermediate_rep_dim) f32 log-probs."""
    B, C = token_ids.shape
    V, E = emb_table.shape
    D_in = C * E
    H = w_lin.shape[1]
    assert w_lin.shape[0] == D_in
    CV = C * V

    # Fold the embedding into the linear weight once, in f32 (wrapper-side XLA op):
    #   x_flat @ W == sum_c one_hot(ids[:, c]) @ (emb @ W[c*E:(c+1)*E, :])
    w3 = w_lin.reshape(C, E, H)
    fused = jnp.einsum("ve,ceh->cvh", emb_table, w3,
                       precision=jax.lax.Precision.HIGHEST).reshape(CV, H)
    fused = fused.astype(jnp.float32)
    b2d = b_lin.reshape(1, H).astype(jnp.float32)

    # Batch tile: large (amortize ~0.35 us/grid-step overhead) but keep >= 2 grid
    # steps when the batch allows, so both v7x TensorCores get work.  Pad B up to a
    # tile multiple (token id 0 is valid; padded rows are sliced off afterwards).
    B8 = _round_up(B, 8)
    if B8 <= 8:
        TB = B8
    else:
        TB = min(block_b, _round_up(B8 // 2, 8))
    Bp = _round_up(B, TB)
    if Bp != B:
        token_ids = jnp.pad(token_ids, ((0, Bp - B), (0, 0)))

    grid = (Bp // TB,)
    cost = pl.CostEstimate(
        flops=2 * Bp * CV * H,
        transcendentals=Bp * (H + 1),
        bytes_accessed=Bp * C * 4 + CV * H * 4 + H * 4 + Bp * H * 4,
    )

    out = pl.pallas_call(
        nnlm_kernel,
        out_shape=jax.ShapeDtypeStruct((Bp, H), jnp.float32),
        grid_spec=pltpu.PrefetchScalarGridSpec(
            num_scalar_prefetch=0,
            grid=grid,
            in_specs=[
                # token ids: tiled along batch -> auto double-buffered / pipelined.
                pl.BlockSpec((TB, C), lambda i: (i, 0)),
                # fused emb@W table / bias: constant block index -> VMEM-resident
                # across grid steps (no per-step re-DMA); ~CV*H*4 bytes, far below
                # the 64 MiB v7x / 128 MiB v5e-v6e VMEM budgets at these sizes.
                pl.BlockSpec((CV, H), lambda i: (0, 0)),
                pl.BlockSpec((1, H), lambda i: (0, 0)),
            ],
            out_specs=pl.BlockSpec((TB, H), lambda i: (i, 0)),
        ),
        compiler_params=pltpu.CompilerParams(
            # Batch tiles are independent -> shard across both TensorCores on v7x;
            # neutral on v5e/v6e.
            dimension_semantics=("parallel",)),
        cost_estimate=cost,
    )(token_ids, fused, b2d)

    return out[:B]


def reference_forward(token_ids, emb_table, w_lin, b_lin):
    B = token_ids.shape[0]
    x = jnp.take(emb_table, token_ids, axis=0).reshape(B, -1)
    h = x @ w_lin + b_lin  # default-precision reference is fine; kernel path is HIGHEST
    h = jnp.clip(
        jnp.dot(x, w_lin, precision=jax.lax.Precision.HIGHEST) + b_lin, -1.0, 1.0)
    return jax.nn.log_softmax(h, axis=1)


if __name__ == "__main__":
    # Sizes consistent with the module's forward; batch sized so the grid has 2 steps.
    vocab_size = 32
    embedding_dim = 16
    context_size = 4
    intermediate_rep_dim = 128
    batch = 256
    D_in = context_size * embedding_dim

    key = jax.random.PRNGKey(0)
    k_emb, k_w, k_b, k_ids = jax.random.split(key, 4)

    emb_table = jax.random.normal(k_emb, (vocab_size, embedding_dim), jnp.float32)
    bound = 1.0 / jnp.sqrt(D_in)
    w_lin = jax.random.uniform(k_w, (D_in, intermediate_rep_dim), jnp.float32,
                               -bound, bound)
    b_lin = jax.random.uniform(k_b, (intermediate_rep_dim,), jnp.float32,
                               -bound, bound)
    # NOTE: the module's self.out Linear is defined in __init__ but unused in forward,
    # so it is intentionally not part of the kernel.

    token_ids = jax.random.randint(k_ids, (batch, context_size), 0, vocab_size,
                                   dtype=jnp.int32)

    log_probs = nnlm_forward(token_ids, emb_table, w_lin, b_lin)
    log_probs = jax.block_until_ready(log_probs)

    ref = reference_forward(token_ids, emb_table, w_lin, b_lin)
    assert log_probs.shape == (batch, intermediate_rep_dim)
    # f32 fused table + exact one-hot select + HIGHEST-precision matmul -> near-f32.
    max_err = float(jnp.max(jnp.abs(log_probs - ref)))
    assert max_err < 5e-4, f"max abs error {max_err}"

    print("KERNEL_OK")
</pallas_src>

<mosaic_0001>
module attributes {stable_mosaic.version = 11 : i64} {
  func.func @nnlm_kernel(%arg0: i32, %arg1: memref<128x4xi32, #tpu.memory_space<vmem>>, %arg2: memref<128x128xf32, #tpu.memory_space<vmem>>, %arg3: memref<1x128xf32, #tpu.memory_space<vmem>>, %arg4: memref<128x128xf32, #tpu.memory_space<vmem>>) attributes {dimension_semantics = [#tpu.dimension_semantics<parallel>], iteration_bounds = array<i64: 2>, scalar_prefetch = 0 : i64, scratch_operands = 0 : i64, tpu.core_type = #tpu.core_type<tc>, window_params = [{transform_indices = @transform_0, window_bounds = array<i64: 128, 4>}, {pipeline_mode = #tpu.pipeline_mode<synchronous>, transform_indices = @transform_1, window_bounds = array<i64: 128, 128>}, {pipeline_mode = #tpu.pipeline_mode<synchronous>, transform_indices = @transform_2, window_bounds = array<i64: 1, 128>}, {transform_indices = @transform_3, window_bounds = array<i64: 128, 128>}]} {
    %c0 = arith.constant 0 : index
    %c0_0 = arith.constant 0 : index
    %0 = vector.load %arg1[%c0, %c0_0] : memref<128x4xi32, #tpu.memory_space<vmem>>, vector<128x4xi32>
    %1 = tpu.iota {dimensions = array<i32: 1>} : vector<128x128xi32>
    %cst = arith.constant 0.000000e+00 : f32
    %2 = vector.broadcast %cst : f32 to vector<128x128xf32>
    %3 = vector.extract_strided_slice %0 {offsets = [0, 0], sizes = [128, 1], strides = [1, 1]} : vector<128x4xi32> to vector<128x1xi32>
    %c0_i32 = arith.constant 0 : i32
    %4 = vector.broadcast %c0_i32 : i32 to vector<128x1xi32>
    %5 = arith.addi %3, %4 : vector<128x1xi32>
    %6 = vector.broadcast %5 : vector<128x1xi32> to vector<128x128xi32>
    %7 = arith.cmpi eq, %1, %6 : vector<128x128xi32>
    %8 = arith.extui %7 : vector<128x128xi1> to vector<128x128xi32>
    %9 = arith.sitofp %8 : vector<128x128xi32> to vector<128x128xf32>
    %10 = arith.addf %2, %9 : vector<128x128xf32>
    %11 = vector.extract_strided_slice %0 {offsets = [0, 1], sizes = [128, 1], strides = [1, 1]} : vector<128x4xi32> to vector<128x1xi32>
    %c32_i32 = arith.constant 32 : i32
    %12 = vector.broadcast %c32_i32 : i32 to vector<128x1xi32>
    %13 = arith.addi %11, %12 : vector<128x1xi32>
    %14 = vector.broadcast %13 : vector<128x1xi32> to vector<128x128xi32>
    %15 = arith.cmpi eq, %1, %14 : vector<128x128xi32>
    %16 = arith.extui %15 : vector<128x128xi1> to vector<128x128xi32>
    %17 = arith.sitofp %16 : vector<128x128xi32> to vector<128x128xf32>
    %18 = arith.addf %10, %17 : vector<128x128xf32>
    %19 = vector.extract_strided_slice %0 {offsets = [0, 2], sizes = [128, 1], strides = [1, 1]} : vector<128x4xi32> to vector<128x1xi32>
    %c64_i32 = arith.constant 64 : i32
    %20 = vector.broadcast %c64_i32 : i32 to vector<128x1xi32>
    %21 = arith.addi %19, %20 : vector<128x1xi32>
    %22 = vector.broadcast %21 : vector<128x1xi32> to vector<128x128xi32>
    %23 = arith.cmpi eq, %1, %22 : vector<128x128xi32>
    %24 = arith.extui %23 : vector<128x128xi1> to vector<128x128xi32>
    %25 = arith.sitofp %24 : vector<128x128xi32> to vector<128x128xf32>
    %26 = arith.addf %18, %25 : vector<128x128xf32>
    %27 = vector.extract_strided_slice %0 {offsets = [0, 3], sizes = [128, 1], strides = [1, 1]} : vector<128x4xi32> to vector<128x1xi32>
    %c96_i32 = arith.constant 96 : i32
    %28 = vector.broadcast %c96_i32 : i32 to vector<128x1xi32>
    %29 = arith.addi %27, %28 : vector<128x1xi32>
    %30 = vector.broadcast %29 : vector<128x1xi32> to vector<128x128xi32>
    %31 = arith.cmpi eq, %1, %30 : vector<128x128xi32>
    %32 = arith.extui %31 : vector<128x128xi1> to vector<128x128xi32>
    %33 = arith.sitofp %32 : vector<128x128xi32> to vector<128x128xf32>
    %34 = arith.addf %26, %33 : vector<128x128xf32>
    %c0_1 = arith.constant 0 : index
    %c0_2 = arith.constant 0 : index
    %35 = vector.load %arg2[%c0_1, %c0_2] : memref<128x128xf32, #tpu.memory_space<vmem>>, vector<128x128xf32>
    %cst_3 = arith.constant dense<0.000000e+00> : vector<128x128xf32>
    %36 = tpu.matmul %34, %35, %cst_3 {dimension_numbers = #tpu.dot_dimension_numbers<[1], [0], [0], [1], [0, 0, 1, 1], [], []>, precision = #tpu.contract_precision<fp32>} : vector<128x128xf32>, vector<128x128xf32>, vector<128x128xf32> -> vector<128x128xf32>
    %c0_4 = arith.constant 0 : index
    %c0_5 = arith.constant 0 : index
    %37 = vector.load %arg3[%c0_4, %c0_5] : memref<1x128xf32, #tpu.memory_space<vmem>>, vector<1x128xf32>
    %38 = vector.broadcast %37 : vector<1x128xf32> to vector<128x128xf32>
    %39 = arith.addf %36, %38 : vector<128x128xf32>
    %cst_6 = arith.constant -1.000000e+00 : f32
    %cst_7 = arith.constant 1.000000e+00 : f32
    %40 = vector.broadcast %cst_6 : f32 to vector<128x128xf32>
    %41 = arith.maximumf %40, %39 : vector<128x128xf32>
    %42 = vector.broadcast %cst_7 : f32 to vector<128x128xf32>
    %43 = arith.minimumf %42, %41 : vector<128x128xf32>
    %cst_8 = arith.constant dense<0xFF800000> : vector<128xf32>
    %44 = vector.multi_reduction <maximumf>, %43, %cst_8 [1] : vector<128x128xf32> to vector<128xf32>
    %45 = vector.shape_cast %44 : vector<128xf32> to vector<128x1xf32>
    %46 = vector.broadcast %45 : vector<128x1xf32> to vector<128x128xf32>
    %47 = arith.subf %43, %46 : vector<128x128xf32>
    %48 = math.exp %47 : vector<128x128xf32>
    %cst_9 = arith.constant dense<0.000000e+00> : vector<128xf32>
    %49 = vector.multi_reduction <add>, %48, %cst_9 [1] : vector<128x128xf32> to vector<128xf32>
    %50 = vector.shape_cast %49 : vector<128xf32> to vector<128x1xf32>
    %51 = math.log %50 : vector<128x1xf32>
    %52 = vector.broadcast %51 : vector<128x1xf32> to vector<128x128xf32>
    %53 = arith.subf %47, %52 : vector<128x128xf32>
    %c0_10 = arith.constant 0 : index
    %c0_11 = arith.constant 0 : index
    %54 = vector.load %arg4[%c0_10, %c0_11] : memref<128x128xf32, #tpu.memory_space<vmem>>, vector<128x128xf32>
    tpu.vector_store %arg4[%c0_10, %c0_11], %53 {strides = array<i32>} : memref<128x128xf32, #tpu.memory_space<vmem>>, vector<128x128xf32>,
    return
  }
  func.func @transform_0(%arg0: i32) -> (i32, i32) {
    %c0_i32 = arith.constant 0 : i32
    %c0_i32_0 = arith.constant 0 : i32
    return %arg0, %c0_i32 : i32, i32
  }
  func.func @transform_1(%arg0: i32) -> (i32, i32) {
    %c0_i32 = arith.constant 0 : i32
    %c0_i32_0 = arith.constant 0 : i32
    %c0_i32_1 = arith.constant 0 : i32
    return %c0_i32, %c0_i32_0 : i32, i32
  }
  func.func @transform_2(%arg0: i32) -> (i32, i32) {
    %c0_i32 = arith.constant 0 : i32
    %c0_i32_0 = arith.constant 0 : i32
    %c0_i32_1 = arith.constant 0 : i32
    return %c0_i32, %c0_i32_0 : i32, i32
  }
  func.func @transform_3(%arg0: i32) -> (i32, i32) {
    %c0_i32 = arith.constant 0 : i32
    %c0_i32_0 = arith.constant 0 : i32
    return %arg0, %c0_i32 : i32, i32
  }
}

</mosaic_0001>

<llo_original>
// kernel: tpu_custom_call.1
$region0: #{tpu_custom_call.1}
  #allocation0 [shape = 'u32[]', space=smem, size = 0x4, offset = 0x4, fixed_abs, tag = 'smem constant byte address 0x4 - core index']
  #allocation1 [shape = 'u32[144,128]{1,0:T(1,128)}', space=vmem, size = 0x12000, scoped, tag = 'internal scratch']
  %s0 = inlined_call_operand.vmem [shape: s32[256,4], index: 0, kind: input, shape index: {}]
  %s1 = inlined_call_operand.vmem [shape: f32[128,128], index: 1, kind: input, shape index: {}]
  %s2 = inlined_call_operand.vmem [shape: f32[1,128], index: 2, kind: input, shape index: {}]
  %s3 = inlined_call_operand.hbm [shape: f32[256,128], index: 3, kind: output, shape index: {}]
  %s4 = sld [smem:[#allocation0]]
  $region45: #{tpu_custom_call.1} parent=0
    _
  %s6 = ssub.s32 1, %s4
  %s7 = scalar_select 0, %s6, %s4
  $region1: #{tpu_custom_call.1} parent=0
    #allocation2 [shape = 'u8[131072]{0}', space=vmem, size = 0x20000, scoped, tag = 'output window, operand 0']
    #allocation3 [shape = 's32[2]{0}', space=sflag, size = 0x8, scoped, tag = 'scoped memory for tpu_custom_call.1']
    %8 = vsyncpa [#allocation3], 0
    %s9 = scalar_lea.sflag [#allocation3], 1
    %10 = vsyncpa %s9, 0
    loop: start=0, step=1, limit=4
    $region2: #{tpu_custom_call.1} parent=1 // loop_pre_header
      _
    $region3: #{tpu_custom_call.1} parent=1 // loop_header
      %s12 = sphi 0, %s16
      %p13 = scmp.ge.s32.totalorder %s12, 4
      %s22 = sphi 0, %s24
      %s25 = sphi 0, %s22
      %s26 = sphi 0, %s25
      %s42 = sphi 0, %s26
      %s46 = sphi 0, %s46
      %s48 = sphi 0, %s46
      %s49 = sphi 0, %s48
      %s63 = sphi 0, %s49
      %s67 = sphi 0, %s67
      %s69 = sphi 0, %s67
      %s70 = sphi 0, %s69
      %s84 = sphi 0, %s70
      %s90 = sphi 0, %s92
      %s93 = sphi 0, %s90
      %s94 = sphi 0, %s93
      %s110 = sphi 0, %s94
    $region4: #{tpu_custom_call.1} parent=1 // loop_header_branch
      %15 = sbr.rel (%p13) target = $region8
    $region5: #{tpu_custom_call.1} parent=1 // loop_body
      %s17 = ssub.s32 %s12, 1
      %s18 = ssub.s32 %s12, 2
      %s19 = sadd.s32 %s12, 1
      %s20 = ssub.s32 %s12, %s19
      %p21 = scmp.eq.s32.totalorder %s20, 0
      %s23 = sadd.s32 %s22, 1
      %s24 = scalar_select %p21, %s22, %s23
      %p27 = pneg %p21
      %p28 = scmp.eq.s32.totalorder %s12, 1
      %p29 = por %p27, %p28
      %p30 = scmp.ne.s32.totalorder %s22, %s25
      %p31 = scmp.eq.s32.totalorder %s12, 0
      %p32 = por %p30, %p31
      %p33 = scmp.ne.s32.totalorder %s22, %s25
      %p34 = scmp.eq.s32.totalorder %s17, 1
      %p35 = por %p33, %p34
      %p36 = scmp.ne.s32.totalorder %s25, %s26
      %p37 = scmp.eq.s32.totalorder %s17, 0
      %p38 = por %p36, %p37
      %p39 = scmp.ne.s32.totalorder %s25, %s26
      %p40 = scmp.eq.s32.totalorder %s18, 1
      %p41 = por %p39, %p40
      %p43 = scmp.ne.s32.totalorder %s26, %s42
      %p44 = scmp.eq.s32.totalorder %s18, 0
      %p45 = por %p43, %p44
      %s47 = sadd.s32 %s46, 1
      %p50 = scmp.eq.s32.totalorder %s12, 1
      %p51 = scmp.ne.s32.totalorder %s46, %s48
      %p52 = scmp.eq.s32.totalorder %s12, 0
      %p53 = por %p51, %p52
      %p54 = scmp.ne.s32.totalorder %s46, %s48
      %p55 = scmp.eq.s32.totalorder %s17, 1
      %p56 = por %p54, %p55
      %p57 = scmp.ne.s32.totalorder %s48, %s49
      %p58 = scmp.eq.s32.totalorder %s17, 0
      %p59 = por %p57, %p58
      %p60 = scmp.ne.s32.totalorder %s48, %s49
      %p61 = scmp.eq.s32.totalorder %s18, 1
      %p62 = por %p60, %p61
      %p64 = scmp.ne.s32.totalorder %s49, %s63
      %p65 = scmp.eq.s32.totalorder %s18, 0
      %p66 = por %p64, %p65
      %s68 = sadd.s32 %s67, 1
      %p71 = scmp.eq.s32.totalorder %s12, 1
      %p72 = scmp.ne.s32.totalorder %s67, %s69
      %p73 = scmp.eq.s32.totalorder %s12, 0
      %p74 = por %p72, %p73
      %p75 = scmp.ne.s32.totalorder %s67, %s69
      %p76 = scmp.eq.s32.totalorder %s17, 1
      %p77 = por %p75, %p76
      %p78 = scmp.ne.s32.totalorder %s69, %s70
      %p79 = scmp.eq.s32.totalorder %s17, 0
      %p80 = por %p78, %p79
      %p81 = scmp.ne.s32.totalorder %s69, %s70
      %p82 = scmp.eq.s32.totalorder %s18, 1
      %p83 = por %p81, %p82
      %p85 = scmp.ne.s32.totalorder %s70, %s84
      %p86 = scmp.eq.s32.totalorder %s18, 0
      %p87 = por %p85, %p86
      %s88 = ssub.s32 %s12, %s19
      %p89 = scmp.eq.s32.totalorder %s88, 0
      %s91 = sadd.s32 %s90, 1
      %s92 = scalar_select %p89, %s90, %s91
      %p95 = pneg %p89
      %p96 = scmp.eq.s32.totalorder %s12, 1
      %p97 = por %p95, %p96
      %p98 = scmp.ne.s32.totalorder %s90, %s93
      %p99 = scmp.eq.s32.totalorder %s12, 0
      %p100 = por %p98, %p99
      %p101 = scmp.ne.s32.totalorder %s90, %s93
      %p102 = scmp.eq.s32.totalorder %s17, 1
      %p103 = por %p101, %p102
      %p104 = scmp.ne.s32.totalorder %s93, %s94
      %p105 = scmp.eq.s32.totalorder %s17, 0
      %p106 = por %p104, %p105
      %p107 = scmp.ne.s32.totalorder %s93, %s94
      %p108 = scmp.eq.s32.totalorder %s18, 1
      %p109 = por %p107, %p108
      %p111 = scmp.ne.s32.totalorder %s94, %s110
      %p112 = scmp.eq.s32.totalorder %s18, 0
      %p113 = por %p111, %p112
      %p114 = scmp.le.s32.totalorder 1, %s12
      %p115 = scmp.lt.s32.totalorder %s12, 3
      %p116 = pnand %p114, %p115
      %p117 = pneg %p116
      // Predicated region
      $region9: #{tpu_custom_call.1} parent=5 // pred_check
        _
      $region10: #{tpu_custom_call.1} parent=5 // pred_check_branch
        %119 = sbr.rel (%p116) target = $region12
      $region11: #{tpu_custom_call.1} parent=5 // pred_region
        %s120 = ssub.s32 %s12, 1
        // Predicated region
        $region13: #{tpu_custom_call.1} parent=11 // pred_check
          %p121 = pneg %p59
        $region14: #{tpu_custom_call.1} parent=11 // pred_check_branch
          %123 = sbr.rel (%p121) target = $region16
        $region15: #{tpu_custom_call.1} parent=11 // pred_region
          _
        $region16: #{tpu_custom_call.1} parent=11 // pred_fallthru
          _
        // Predicated region
        $region17: #{tpu_custom_call.1} parent=11 // pred_check
          %p124 = pneg %p80
        $region18: #{tpu_custom_call.1} parent=11 // pred_check_branch
          %126 = sbr.rel (%p124) target = $region20
        $region19: #{tpu_custom_call.1} parent=11 // pred_region
          _
        $region20: #{tpu_custom_call.1} parent=11 // pred_fallthru
          _
      $region12: #{tpu_custom_call.1} parent=5 // pred_fallthru
        _
      %p127 = scmp.lt.s32.totalorder %s12, 2
      // Predicated region
      $region21: #{tpu_custom_call.1} parent=5 // pred_check
        %p128 = pneg %p127
      $region22: #{tpu_custom_call.1} parent=5 // pred_check_branch
        %130 = sbr.rel (%p128) target = $region24
      $region23: #{tpu_custom_call.1} parent=5 // pred_region
        // Predicated region
        $region25: #{tpu_custom_call.1} parent=23 // pred_check
          %p131 = pneg %p32
        $region26: #{tpu_custom_call.1} parent=23 // pred_check_branch
          %133 = sbr.rel (%p131) target = $region28
        $region27: #{tpu_custom_call.1} parent=23 // pred_region
          %s134 = smul.u32 16, %s12
          %p135 = scmp.lt.s32.totalorder %s134, 31
          %s136 = scalar_select %p135, %s134, 31
          %s137 = smul.addr %s136, 8
          %s138 = scalar_lea.vmem %s0, %s137
          %s139 = smul.u32 16, %s12
        $region28: #{tpu_custom_call.1} parent=23 // pred_fallthru
          _
      $region24: #{tpu_custom_call.1} parent=5 // pred_fallthru
        _
      %p140 = scmp.le.s32.totalorder 1, %s12
      %p141 = scmp.lt.s32.totalorder %s12, 3
      %p142 = pnand %p140, %p141
      %p143 = pneg %p142
      // Predicated region
      $region29: #{tpu_custom_call.1} parent=5 // pred_check
        _
      $region30: #{tpu_custom_call.1} parent=5 // pred_check_branch
        %145 = sbr.rel (%p142) target = $region32
      $region31: #{tpu_custom_call.1} parent=5 // pred_region
        %s146 = ssub.s32 %s12, 1
        %s147 = smul.u32 16, %s17
        %p148 = scmp.lt.s32.totalorder %s147, 31
        %s149 = scalar_select %p148, %s147, 31
        %s150 = smul.addr %s149, 8
        %s151 = scalar_lea.vmem %s0, %s150
        %p152 = pneg %p38
        %p153 = pneg %p35
        %p154 = pneg %p59
        %p155 = pneg %p56
        %p156 = pneg %p80
        %p157 = pneg %p77
        %p158 = pneg %p106
        %p159 = pneg %p103
        %s160 = sand.u32 %s93, 1
        %s161 = scalar_lea.sflag [#allocation3], %s160
        %s162 = sand.u32 %s93, 1
        %s163 = smul.addr %s162, 128
        %s164 = scalar_lea.vmem [#allocation2], %s163
        %s165 = smul.u32 16, %s17
        %p166 = scmp.lt.s32.totalorder %s165, 31
        %s167 = scalar_select %p166, %s165, 31
        %s168 = smul.addr %s167, 8
        %s169 = scalar_lea.vmem %s0, %s168
        %s170 = smul.u32 16, %s17
        %s171 = smul.u32 16, %s17
        %v172 = vld [vmem:[%s169] sm:$0xff]
        %v173 = vld [vmem:[%s169 + $0x8] sm:$0xff]
        %v174 = vld [vmem:[%s169 + $0x10] sm:$0xff]
        %v175 = vld [vmem:[%s169 + $0x18] sm:$0xff]
        %v176 = vld [vmem:[%s169 + $0x20] sm:$0xff]
        %v177 = vld [vmem:[%s169 + $0x28] sm:$0xff]
        %v178 = vld [vmem:[%s169 + $0x30] sm:$0xff]
        %v179 = vld [vmem:[%s169 + $0x38] sm:$0xff]
        %v180 = vld [vmem:[%s169 + $0x40] sm:$0xff]
        %v181 = vld [vmem:[%s169 + $0x48] sm:$0xff]
        %v182 = vld [vmem:[%s169 + $0x50] sm:$0xff]
        %v183 = vld [vmem:[%s169 + $0x58] sm:$0xff]
        %v184 = vld [vmem:[%s169 + $0x60] sm:$0xff]
        %v185 = vld [vmem:[%s169 + $0x68] sm:$0xff]
        %v186 = vld [vmem:[%s169 + $0x70] sm:$0xff]
        %v187 = vld [vmem:[%s169 + $0x78] sm:$0xff]
        %v188 = vlaneseq
        %v189 = vand.u32 %v188, 127
        %190 = vset.pattern.permute.xlu0 0
        %191 = vperm.xlu0 %190, %v172
        %v192 = vpop.permute.xlu0 %191
        %193 = vset.pattern.permute.xlu0 0
        %194 = vperm.xlu0 %193, %v173
        %v195 = vpop.permute.xlu0 %194
        %196 = vset.pattern.permute.xlu0 0
        %197 = vperm.xlu0 %196, %v174
        %v198 = vpop.permute.xlu0 %197
        %199 = vset.pattern.permute.xlu0 0
        %200 = vperm.xlu0 %199, %v175
        %v201 = vpop.permute.xlu0 %200
        %202 = vset.pattern.permute.xlu0 0
        %203 = vperm.xlu0 %202, %v176
        %v204 = vpop.permute.xlu0 %203
        %205 = vset.pattern.permute.xlu0 0
        %206 = vperm.xlu0 %205, %v177
        %v207 = vpop.permute.xlu0 %206
        %208 = vset.pattern.permute.xlu0 0
        %209 = vperm.xlu0 %208, %v178
        %v210 = vpop.permute.xlu0 %209
        %211 = vset.pattern.permute.xlu0 0
        %212 = vperm.xlu0 %211, %v179
        %v213 = vpop.permute.xlu0 %212
        %214 = vset.pattern.permute.xlu0 0
        %215 = vperm.xlu0 %214, %v180
        %v216 = vpop.permute.xlu0 %215
        %217 = vset.pattern.permute.xlu0 0
        %218 = vperm.xlu0 %217, %v181
        %v219 = vpop.permute.xlu0 %218
        %220 = vset.pattern.permute.xlu0 0
        %221 = vperm.xlu0 %220, %v182
        %v222 = vpop.permute.xlu0 %221
        %223 = vset.pattern.permute.xlu0 0
        %224 = vperm.xlu0 %223, %v183
        %v225 = vpop.permute.xlu0 %224
        %226 = vset.pattern.permute.xlu0 0
        %227 = vperm.xlu0 %226, %v184
        %v228 = vpop.permute.xlu0 %227
        %229 = vset.pattern.permute.xlu0 0
        %230 = vperm.xlu0 %229, %v185
        %v231 = vpop.permute.xlu0 %230
        %232 = vset.pattern.permute.xlu0 0
        %233 = vperm.xlu0 %232, %v186
        %v234 = vpop.permute.xlu0 %233
        %235 = vset.pattern.permute.xlu0 0
        %236 = vperm.xlu0 %235, %v187
        %v237 = vpop.permute.xlu0 %236
        %vm238 = vcmp.eq.s32.totalorder %v189, %v192
        %vm239 = vcmp.eq.s32.totalorder %v189, %v195
        %vm240 = vcmp.eq.s32.totalorder %v189, %v198
        %vm241 = vcmp.eq.s32.totalorder %v189, %v201
        %vm242 = vcmp.eq.s32.totalorder %v189, %v204
        %vm243 = vcmp.eq.s32.totalorder %v189, %v207
        %vm244 = vcmp.eq.s32.totalorder %v189, %v210
        %vm245 = vcmp.eq.s32.totalorder %v189, %v213
        %vm246 = vcmp.eq.s32.totalorder %v189, %v216
        %vm247 = vcmp.eq.s32.totalorder %v189, %v219
        %vm248 = vcmp.eq.s32.totalorder %v189, %v222
        %vm249 = vcmp.eq.s32.totalorder %v189, %v225
        %vm250 = vcmp.eq.s32.totalorder %v189, %v228
        %vm251 = vcmp.eq.s32.totalorder %v189, %v231
        %vm252 = vcmp.eq.s32.totalorder %v189, %v234
        %vm253 = vcmp.eq.s32.totalorder %v189, %v237
        %v254 = vsel %vm238, 1, 0
        %v255 = vsel %vm239, 1, 0
        %v256 = vsel %vm240, 1, 0
        %v257 = vsel %vm241, 1, 0
        %v258 = vsel %vm242, 1, 0
        %v259 = vsel %vm243, 1, 0
        %v260 = vsel %vm244, 1, 0
        %v261 = vsel %vm245, 1, 0
        %v262 = vsel %vm246, 1, 0
        %v263 = vsel %vm247, 1, 0
        %v264 = vsel %vm248, 1, 0
        %v265 = vsel %vm249, 1, 0
        %v266 = vsel %vm250, 1, 0
        %v267 = vsel %vm251, 1, 0
        %v268 = vsel %vm252, 1, 0
        %v269 = vsel %vm253, 1, 0
        %v270 = vcvt.s32.f32 %v254
        %v271 = vcvt.s32.f32 %v255
        %v272 = vcvt.s32.f32 %v256
        %v273 = vcvt.s32.f32 %v257
        %v274 = vcvt.s32.f32 %v258
        %v275 = vcvt.s32.f32 %v259
        %v276 = vcvt.s32.f32 %v260
        %v277 = vcvt.s32.f32 %v261
        %v278 = vcvt.s32.f32 %v262
        %v279 = vcvt.s32.f32 %v263
        %v280 = vcvt.s32.f32 %v264
        %v281 = vcvt.s32.f32 %v265
        %v282 = vcvt.s32.f32 %v266
        %v283 = vcvt.s32.f32 %v267
        %v284 = vcvt.s32.f32 %v268
        %v285 = vcvt.s32.f32 %v269
        %v286 = vadd.f32 %v270, 0.0
        %v287 = vadd.f32 %v271, 0.0
        %v288 = vadd.f32 %v272, 0.0
        %v289 = vadd.f32 %v273, 0.0
        %v290 = vadd.f32 %v274, 0.0
        %v291 = vadd.f32 %v275, 0.0
        %v292 = vadd.f32 %v276, 0.0
        %v293 = vadd.f32 %v277, 0.0
        %v294 = vadd.f32 %v278, 0.0
        %v295 = vadd.f32 %v279, 0.0
        %v296 = vadd.f32 %v280, 0.0
        %v297 = vadd.f32 %v281, 0.0
        %v298 = vadd.f32 %v282, 0.0
        %v299 = vadd.f32 %v283, 0.0
        %v300 = vadd.f32 %v284, 0.0
        %v301 = vadd.f32 %v285, 0.0
        %v302 = vadd.s32 %v172, 32
        %v303 = vadd.s32 %v173, 32
        %v304 = vadd.s32 %v174, 32
        %v305 = vadd.s32 %v175, 32
        %v306 = vadd.s32 %v176, 32
        %v307 = vadd.s32 %v177, 32
        %v308 = vadd.s32 %v178, 32
        %v309 = vadd.s32 %v179, 32
        %v310 = vadd.s32 %v180, 32
        %v311 = vadd.s32 %v181, 32
        %v312 = vadd.s32 %v182, 32
        %v313 = vadd.s32 %v183, 32
        %v314 = vadd.s32 %v184, 32
        %v315 = vadd.s32 %v185, 32
        %v316 = vadd.s32 %v186, 32
        %v317 = vadd.s32 %v187, 32
        %318 = vset.pattern.permute.xlu0 1
        %319 = vperm.xlu0 %318, %v302
        %v320 = vpop.permute.xlu0 %319
        %321 = vset.pattern.permute.xlu0 1
        %322 = vperm.xlu0 %321, %v303
        %v323 = vpop.permute.xlu0 %322
        %324 = vset.pattern.permute.xlu0 1
        %325 = vperm.xlu0 %324, %v304
        %v326 = vpop.permute.xlu0 %325
        %327 = vset.pattern.permute.xlu0 1
        %328 = vperm.xlu0 %327, %v305
        %v329 = vpop.permute.xlu0 %328
        %330 = vset.pattern.permute.xlu0 1
        %331 = vperm.xlu0 %330, %v306
        %v332 = vpop.permute.xlu0 %331
        %333 = vset.pattern.permute.xlu0 1
        %334 = vperm.xlu0 %333, %v307
        %v335 = vpop.permute.xlu0 %334
        %336 = vset.pattern.permute.xlu0 1
        %337 = vperm.xlu0 %336, %v308
        %v338 = vpop.permute.xlu0 %337
        %339 = vset.pattern.permute.xlu0 1
        %340 = vperm.xlu0 %339, %v309
        %v341 = vpop.permute.xlu0 %340
        %342 = vset.pattern.permute.xlu0 1
        %343 = vperm.xlu0 %342, %v310
        %v344 = vpop.permute.xlu0 %343
        %345 = vset.pattern.permute.xlu0 1
        %346 = vperm.xlu0 %345, %v311
        %v347 = vpop.permute.xlu0 %346
        %348 = vset.pattern.permute.xlu0 1
        %349 = vperm.xlu0 %348, %v312
        %v350 = vpop.permute.xlu0 %349
        %351 = vset.pattern.permute.xlu0 1
        %352 = vperm.xlu0 %351, %v313
        %v353 = vpop.permute.xlu0 %352
        %354 = vset.pattern.permute.xlu0 1
        %355 = vperm.xlu0 %354, %v314
        %v356 = vpop.permute.xlu0 %355
        %357 = vset.pattern.permute.xlu0 1
        %358 = vperm.xlu0 %357, %v315
        %v359 = vpop.permute.xlu0 %358
        %360 = vset.pattern.permute.xlu0 1
        %361 = vperm.xlu0 %360, %v316
        %v362 = vpop.permute.xlu0 %361
        %363 = vset.pattern.permute.xlu0 1
        %364 = vperm.xlu0 %363, %v317
        %v365 = vpop.permute.xlu0 %364
        %vm366 = vcmp.eq.s32.totalorder %v189, %v320
        %vm367 = vcmp.eq.s32.totalorder %v189, %v323
        %vm368 = vcmp.eq.s32.totalorder %v189, %v326
        %vm369 = vcmp.eq.s32.totalorder %v189, %v329
        %vm370 = vcmp.eq.s32.totalorder %v189, %v332
        %vm371 = vcmp.eq.s32.totalorder %v189, %v335
        %vm372 = vcmp.eq.s32.totalorder %v189, %v338
        %vm373 = vcmp.eq.s32.totalorder %v189, %v341
        %vm374 = vcmp.eq.s32.totalorder %v189, %v344
        %vm375 = vcmp.eq.s32.totalorder %v189, %v347
        %vm376 = vcmp.eq.s32.totalorder %v189, %v350
        %vm377 = vcmp.eq.s32.totalorder %v189, %v353
        %vm378 = vcmp.eq.s32.totalorder %v189, %v356
        %vm379 = vcmp.eq.s32.totalorder %v189, %v359
        %vm380 = vcmp.eq.s32.totalorder %v189, %v362
        %vm381 = vcmp.eq.s32.totalorder %v189, %v365
        %v382 = vsel %vm366, 1, 0
        %v383 = vsel %vm367, 1, 0
        %v384 = vsel %vm368, 1, 0
        %v385 = vsel %vm369, 1, 0
        %v386 = vsel %vm370, 1, 0
        %v387 = vsel %vm371, 1, 0
        %v388 = vsel %vm372, 1, 0
        %v389 = vsel %vm373, 1, 0
        %v390 = vsel %vm374, 1, 0
        %v391 = vsel %vm375, 1, 0
        %v392 = vsel %vm376, 1, 0
        %v393 = vsel %vm377, 1, 0
        %v394 = vsel %vm378, 1, 0
        %v395 = vsel %vm379, 1, 0
        %v396 = vsel %vm380, 1, 0
        %v397 = vsel %vm381, 1, 0
        %v398 = vcvt.s32.f32 %v382
        %v399 = vcvt.s32.f32 %v383
        %v400 = vcvt.s32.f32 %v384
        %v401 = vcvt.s32.f32 %v385
        %v402 = vcvt.s32.f32 %v386
        %v403 = vcvt.s32.f32 %v387
        %v404 = vcvt.s32.f32 %v388
        %v405 = vcvt.s32.f32 %v389
        %v406 = vcvt.s32.f32 %v390
        %v407 = vcvt.s32.f32 %v391
        %v408 = vcvt.s32.f32 %v392
        %v409 = vcvt.s32.f32 %v393
        %v410 = vcvt.s32.f32 %v394
        %v411 = vcvt.s32.f32 %v395
        %v412 = vcvt.s32.f32 %v396
        %v413 = vcvt.s32.f32 %v397
        %v414 = vadd.f32 %v286, %v398
        %v415 = vadd.f32 %v287, %v399
        %v416 = vadd.f32 %v288, %v400
        %v417 = vadd.f32 %v289, %v401
        %v418 = vadd.f32 %v290, %v402
        %v419 = vadd.f32 %v291, %v403
        %v420 = vadd.f32 %v292, %v404
        %v421 = vadd.f32 %v293, %v405
        %v422 = vadd.f32 %v294, %v406
        %v423 = vadd.f32 %v295, %v407
        %v424 = vadd.f32 %v296, %v408
        %v425 = vadd.f32 %v297, %v409
        %v426 = vadd.f32 %v298, %v410
        %v427 = vadd.f32 %v299, %v411
        %v428 = vadd.f32 %v300, %v412
        %v429 = vadd.f32 %v301, %v413
        %v430 = vadd.s32 %v172, 64
        %v431 = vadd.s32 %v173, 64
        %v432 = vadd.s32 %v174, 64
        %v433 = vadd.s32 %v175, 64
        %v434 = vadd.s32 %v176, 64
        %v435 = vadd.s32 %v177, 64
        %v436 = vadd.s32 %v178, 64
        %v437 = vadd.s32 %v179, 64
        %v438 = vadd.s32 %v180, 64
        %v439 = vadd.s32 %v181, 64
        %v440 = vadd.s32 %v182, 64
        %v441 = vadd.s32 %v183, 64
        %v442 = vadd.s32 %v184, 64
        %v443 = vadd.s32 %v185, 64
        %v444 = vadd.s32 %v186, 64
        %v445 = vadd.s32 %v187, 64
        %446 = vset.pattern.permute.xlu0 2
        %447 = vperm.xlu0 %446, %v430
        %v448 = vpop.permute.xlu0 %447
        %449 = vset.pattern.permute.xlu0 2
        %450 = vperm.xlu0 %449, %v431
        %v451 = vpop.permute.xlu0 %450
        %452 = vset.pattern.permute.xlu0 2
        %453 = vperm.xlu0 %452, %v432
        %v454 = vpop.permute.xlu0 %453
        %455 = vset.pattern.permute.xlu0 2
        %456 = vperm.xlu0 %455, %v433
        %v457 = vpop.permute.xlu0 %456
        %458 = vset.pattern.permute.xlu0 2
        %459 = vperm.xlu0 %458, %v434
        %v460 = vpop.permute.xlu0 %459
        %461 = vset.pattern.permute.xlu0 2
        %462 = vperm.xlu0 %461, %v435
        %v463 = vpop.permute.xlu0 %462
        %464 = vset.pattern.permute.xlu0 2
        %465 = vperm.xlu0 %464, %v436
        %v466 = vpop.permute.xlu0 %465
        %467 = vset.pattern.permute.xlu0 2
        %468 = vperm.xlu0 %467, %v437
        %v469 = vpop.permute.xlu0 %468
        %470 = vset.pattern.permute.xlu0 2
        %471 = vperm.xlu0 %470, %v438
        %v472 = vpop.permute.xlu0 %471
        %473 = vset.pattern.permute.xlu0 2
        %474 = vperm.xlu0 %473, %v439
        %v475 = vpop.permute.xlu0 %474
        %476 = vset.pattern.permute.xlu0 2
        %477 = vperm.xlu0 %476, %v440
        %v478 = vpop.permute.xlu0 %477
        %479 = vset.pattern.permute.xlu0 2
        %480 = vperm.xlu0 %479, %v441
        %v481 = vpop.permute.xlu0 %480
        %482 = vset.pattern.permute.xlu0 2
        %483 = vperm.xlu0 %482, %v442
        %v484 = vpop.permute.xlu0 %483
        %485 = vset.pattern.permute.xlu0 2
        %486 = vperm.xlu0 %485, %v443
        %v487 = vpop.permute.xlu0 %486
        %488 = vset.pattern.permute.xlu0 2
        %489 = vperm.xlu0 %488, %v444
        %v490 = vpop.permute.xlu0 %489
        %491 = vset.pattern.permute.xlu0 2
        %492 = vperm.xlu0 %491, %v445
        %v493 = vpop.permute.xlu0 %492
        %vm494 = vcmp.eq.s32.totalorder %v189, %v448
        %vm495 = vcmp.eq.s32.totalorder %v189, %v451
        %vm496 = vcmp.eq.s32.totalorder %v189, %v454
        %vm497 = vcmp.eq.s32.totalorder %v189, %v457
        %vm498 = vcmp.eq.s32.totalorder %v189, %v460
        %vm499 = vcmp.eq.s32.totalorder %v189, %v463
        %vm500 = vcmp.eq.s32.totalorder %v189, %v466
        %vm501 = vcmp.eq.s32.totalorder %v189, %v469
        %vm502 = vcmp.eq.s32.totalorder %v189, %v472
        %vm503 = vcmp.eq.s32.totalorder %v189, %v475
        %vm504 = vcmp.eq.s32.totalorder %v189, %v478
        %vm505 = vcmp.eq.s32.totalorder %v189, %v481
        %vm506 = vcmp.eq.s32.totalorder %v189, %v484
        %vm507 = vcmp.eq.s32.totalorder %v189, %v487
        %vm508 = vcmp.eq.s32.totalorder %v189, %v490
        %vm509 = vcmp.eq.s32.totalorder %v189, %v493
        %v510 = vsel %vm494, 1, 0
        %v511 = vsel %vm495, 1, 0
        %v512 = vsel %vm496, 1, 0
        %v513 = vsel %vm497, 1, 0
        %v514 = vsel %vm498, 1, 0
        %v515 = vsel %vm499, 1, 0
        %v516 = vsel %vm500, 1, 0
        %v517 = vsel %vm501, 1, 0
        %v518 = vsel %vm502, 1, 0
        %v519 = vsel %vm503, 1, 0
        %v520 = vsel %vm504, 1, 0
        %v521 = vsel %vm505, 1, 0
        %v522 = vsel %vm506, 1, 0
        %v523 = vsel %vm507, 1, 0
        %v524 = vsel %vm508, 1, 0
        %v525 = vsel %vm509, 1, 0
        %v526 = vcvt.s32.f32 %v510
        %v527 = vcvt.s32.f32 %v511
        %v528 = vcvt.s32.f32 %v512
        %v529 = vcvt.s32.f32 %v513
        %v530 = vcvt.s32.f32 %v514
        %v531 = vcvt.s32.f32 %v515
        %v532 = vcvt.s32.f32 %v516
        %v533 = vcvt.s32.f32 %v517
        %v534 = vcvt.s32.f32 %v518
        %v535 = vcvt.s32.f32 %v519
        %v536 = vcvt.s32.f32 %v520
        %v537 = vcvt.s32.f32 %v521
        %v538 = vcvt.s32.f32 %v522
        %v539 = vcvt.s32.f32 %v523
        %v540 = vcvt.s32.f32 %v524
        %v541 = vcvt.s32.f32 %v525
        %v542 = vadd.f32 %v414, %v526
        %v543 = vadd.f32 %v415, %v527
        %v544 = vadd.f32 %v416, %v528
        %v545 = vadd.f32 %v417, %v529
        %v546 = vadd.f32 %v418, %v530
        %v547 = vadd.f32 %v419, %v531
        %v548 = vadd.f32 %v420, %v532
        %v549 = vadd.f32 %v421, %v533
        %v550 = vadd.f32 %v422, %v534
        %v551 = vadd.f32 %v423, %v535
        %v552 = vadd.f32 %v424, %v536
        %v553 = vadd.f32 %v425, %v537
        %v554 = vadd.f32 %v426, %v538
        %v555 = vadd.f32 %v427, %v539
        %v556 = vadd.f32 %v428, %v540
        %v557 = vadd.f32 %v429, %v541
        %v558 = vadd.s32 %v172, 96
        %v559 = vadd.s32 %v173, 96
        %v560 = vadd.s32 %v174, 96
        %v561 = vadd.s32 %v175, 96
        %v562 = vadd.s32 %v176, 96
        %v563 = vadd.s32 %v177, 96
        %v564 = vadd.s32 %v178, 96
        %v565 = vadd.s32 %v179, 96
        %v566 = vadd.s32 %v180, 96
        %v567 = vadd.s32 %v181, 96
        %v568 = vadd.s32 %v182, 96
        %v569 = vadd.s32 %v183, 96
        %v570 = vadd.s32 %v184, 96
        %v571 = vadd.s32 %v185, 96
        %v572 = vadd.s32 %v186, 96
        %v573 = vadd.s32 %v187, 96
        %574 = vset.pattern.permute.xlu0 3
        %575 = vperm.xlu0 %574, %v558
        %v576 = vpop.permute.xlu0 %575
        %577 = vset.pattern.permute.xlu0 3
        %578 = vperm.xlu0 %577, %v559
        %v579 = vpop.permute.xlu0 %578
        %580 = vset.pattern.permute.xlu0 3
        %581 = vperm.xlu0 %580, %v560
        %v582 = vpop.permute.xlu0 %581
        %583 = vset.pattern.permute.xlu0 3
        %584 = vperm.xlu0 %583, %v561
        %v585 = vpop.permute.xlu0 %584
        %586 = vset.pattern.permute.xlu0 3
        %587 = vperm.xlu0 %586, %v562
        %v588 = vpop.permute.xlu0 %587
        %589 = vset.pattern.permute.xlu0 3
        %590 = vperm.xlu0 %589, %v563
        %v591 = vpop.permute.xlu0 %590
        %592 = vset.pattern.permute.xlu0 3
        %593 = vperm.xlu0 %592, %v564
        %v594 = vpop.permute.xlu0 %593
        %595 = vset.pattern.permute.xlu0 3
        %596 = vperm.xlu0 %595, %v565
        %v597 = vpop.permute.xlu0 %596
        %598 = vset.pattern.permute.xlu0 3
        %599 = vperm.xlu0 %598, %v566
        %v600 = vpop.permute.xlu0 %599
        %601 = vset.pattern.permute.xlu0 3
        %602 = vperm.xlu0 %601, %v567
        %v603 = vpop.permute.xlu0 %602
        %604 = vset.pattern.permute.xlu0 3
        %605 = vperm.xlu0 %604, %v568
        %v606 = vpop.permute.xlu0 %605
        %607 = vset.pattern.permute.xlu0 3
        %608 = vperm.xlu0 %607, %v569
        %v609 = vpop.permute.xlu0 %608
        %610 = vset.pattern.permute.xlu0 3
        %611 = vperm.xlu0 %610, %v570
        %v612 = vpop.permute.xlu0 %611
        %613 = vset.pattern.permute.xlu0 3
        %614 = vperm.xlu0 %613, %v571
        %v615 = vpop.permute.xlu0 %614
        %616 = vset.pattern.permute.xlu0 3
        %617 = vperm.xlu0 %616, %v572
        %v618 = vpop.permute.xlu0 %617
        %619 = vset.pattern.permute.xlu0 3
        %620 = vperm.xlu0 %619, %v573
        %v621 = vpop.permute.xlu0 %620
        %vm622 = vcmp.eq.s32.totalorder %v189, %v576
        %vm623 = vcmp.eq.s32.totalorder %v189, %v579
        %vm624 = vcmp.eq.s32.totalorder %v189, %v582
        %vm625 = vcmp.eq.s32.totalorder %v189, %v585
        %vm626 = vcmp.eq.s32.totalorder %v189, %v588
        %vm627 = vcmp.eq.s32.totalorder %v189, %v591
        %vm628 = vcmp.eq.s32.totalorder %v189, %v594
        %vm629 = vcmp.eq.s32.totalorder %v189, %v597
        %vm630 = vcmp.eq.s32.totalorder %v189, %v600
        %vm631 = vcmp.eq.s32.totalorder %v189, %v603
        %vm632 = vcmp.eq.s32.totalorder %v189, %v606
        %vm633 = vcmp.eq.s32.totalorder %v189, %v609
        %vm634 = vcmp.eq.s32.totalorder %v189, %v612
        %vm635 = vcmp.eq.s32.totalorder %v189, %v615
        %vm636 = vcmp.eq.s32.totalorder %v189, %v618
        %vm637 = vcmp.eq.s32.totalorder %v189, %v621
        %v638 = vsel %vm622, 1, 0
        %v639 = vsel %vm623, 1, 0
        %v640 = vsel %vm624, 1, 0
        %v641 = vsel %vm625, 1, 0
        %v642 = vsel %vm626, 1, 0
        %v643 = vsel %vm627, 1, 0
        %v644 = vsel %vm628, 1, 0
        %v645 = vsel %vm629, 1, 0
        %v646 = vsel %vm630, 1, 0
        %v647 = vsel %vm631, 1, 0
        %v648 = vsel %vm632, 1, 0
        %v649 = vsel %vm633, 1, 0
        %v650 = vsel %vm634, 1, 0
        %v651 = vsel %vm635, 1, 0
        %v652 = vsel %vm636, 1, 0
        %v653 = vsel %vm637, 1, 0
        %v654 = vcvt.s32.f32 %v638
        %v655 = vcvt.s32.f32 %v639
        %v656 = vcvt.s32.f32 %v640
        %v657 = vcvt.s32.f32 %v641
        %v658 = vcvt.s32.f32 %v642
        %v659 = vcvt.s32.f32 %v643
        %v660 = vcvt.s32.f32 %v644
        %v661 = vcvt.s32.f32 %v645
        %v662 = vcvt.s32.f32 %v646
        %v663 = vcvt.s32.f32 %v647
        %v664 = vcvt.s32.f32 %v648
        %v665 = vcvt.s32.f32 %v649
        %v666 = vcvt.s32.f32 %v650
        %v667 = vcvt.s32.f32 %v651
        %v668 = vcvt.s32.f32 %v652
        %v669 = vcvt.s32.f32 %v653
        %v670 = vadd.f32 %v542, %v654
        %v671 = vadd.f32 %v543, %v655
        %v672 = vadd.f32 %v544, %v656
        %v673 = vadd.f32 %v545, %v657
        %v674 = vadd.f32 %v546, %v658
        %v675 = vadd.f32 %v547, %v659
        %v676 = vadd.f32 %v548, %v660
        %v677 = vadd.f32 %v549, %v661
        %v678 = vadd.f32 %v550, %v662
        %v679 = vadd.f32 %v551, %v663
        %v680 = vadd.f32 %v552, %v664
        %v681 = vadd.f32 %v553, %v665
        %v682 = vadd.f32 %v554, %v666
        %v683 = vadd.f32 %v555, %v667
        %v684 = vadd.f32 %v556, %v668
        %v685 = vadd.f32 %v557, %v669
        %v686 = vld [vmem:[%s1] sm:$0xff]
        %v687 = vld [vmem:[%s1 + $0x8] sm:$0xff]
        %v688 = vld [vmem:[%s1 + $0x10] sm:$0xff]
        %v689 = vld [vmem:[%s1 + $0x18] sm:$0xff]
        %v690 = vld [vmem:[%s1 + $0x20] sm:$0xff]
        %v691 = vld [vmem:[%s1 + $0x28] sm:$0xff]
        %v692 = vld [vmem:[%s1 + $0x30] sm:$0xff]
        %v693 = vld [vmem:[%s1 + $0x38] sm:$0xff]
        %v694 = vld [vmem:[%s1 + $0x40] sm:$0xff]
        %v695 = vld [vmem:[%s1 + $0x48] sm:$0xff]
        %v696 = vld [vmem:[%s1 + $0x50] sm:$0xff]
        %v697 = vld [vmem:[%s1 + $0x58] sm:$0xff]
        %v698 = vld [vmem:[%s1 + $0x60] sm:$0xff]
        %v699 = vld [vmem:[%s1 + $0x68] sm:$0xff]
        %v700 = vld [vmem:[%s1 + $0x70] sm:$0xff]
        %v701 = vld [vmem:[%s1 + $0x78] sm:$0xff]
        %v702 = vld [vmem:[%s2] sm:$0x1]
        %v704 = vlaneseq
        %v705 = vshrl.u32 %v704, 7
        %v706 = vsub.s32 0, %v705
        %v707 = vrot.slane %v702, %v706
        %709 = vmatprep.subr.mxu0 0.0
        %v710 = vand.u32 %v686, 4294901760
        %711 = vmatpush1.msra.mxu0 %v710
        %712 = vmatprep.subr.mxu0 0.0
        %v713 = vand.u32 %v687, 4294901760
        %714 = vmatpush1.msra.mxu0 %v713
        %715 = vmatprep.subr.mxu0 0.0
        %v716 = vand.u32 %v688, 4294901760
        %717 = vmatpush1.msra.mxu0 %v716
        %718 = vmatprep.subr.mxu0 0.0
        %v719 = vand.u32 %v689, 4294901760
        %720 = vmatpush1.msra.mxu0 %v719
        %721 = vmatprep.subr.mxu0 0.0
        %v722 = vand.u32 %v690, 4294901760
        %723 = vmatpush1.msra.mxu0 %v722
        %724 = vmatprep.subr.mxu0 0.0
        %v725 = vand.u32 %v691, 4294901760
        %726 = vmatpush1.msra.mxu0 %v725
        %727 = vmatprep.subr.mxu0 0.0
        %v728 = vand.u32 %v692, 4294901760
        %729 = vmatpush1.msra.mxu0 %v728
        %730 = vmatprep.subr.mxu0 0.0
        %v731 = vand.u32 %v693, 4294901760
        %732 = vmatpush1.msra.mxu0 %v731
        %733 = vmatprep.subr.mxu0 0.0
        %v734 = vand.u32 %v694, 4294901760
        %735 = vmatpush1.msra.mxu0 %v734
        %736 = vmatprep.subr.mxu0 0.0
        %v737 = vand.u32 %v695, 4294901760
        %738 = vmatpush1.msra.mxu0 %v737
        %739 = vmatprep.subr.mxu0 0.0
        %v740 = vand.u32 %v696, 4294901760
        %741 = vmatpush1.msra.mxu0 %v740
        %742 = vmatprep.subr.mxu0 0.0
        %v743 = vand.u32 %v697, 4294901760
        %744 = vmatpush1.msra.mxu0 %v743
        %745 = vmatprep.subr.mxu0 0.0
        %v746 = vand.u32 %v698, 4294901760
        %747 = vmatpush1.msra.mxu0 %v746
        %748 = vmatprep.subr.mxu0 0.0
        %v749 = vand.u32 %v699, 4294901760
        %750 = vmatpush1.msra.mxu0 %v749
        %751 = vmatprep.subr.mxu0 0.0
        %v752 = vand.u32 %v700, 4294901760
        %753 = vmatpush1.msra.mxu0 %v752
        %754 = vmatprep.subr.mxu0 0.0
        %v755 = vand.u32 %v701, 4294901760
        %756 = vmatpush1.msra.mxu0 %v755
        %757 = vmatprep.subr.mxu0 0.0
        %758 = vmatpush1.msra.mxu0 0.0
        %759 = vmatprep.subr.mxu0 0.0
        %760 = vmatpush1.msra.mxu0 0.0
        %761 = vmatprep.subr.mxu0 0.0
        %762 = vmatpush1.msra.mxu0 0.0
        %763 = vmatprep.subr.mxu0 0.0
        %764 = vmatpush1.msra.mxu0 0.0
        %765 = vmatprep.subr.mxu0 0.0
        %766 = vmatpush1.msra.mxu0 0.0
        %767 = vmatprep.subr.mxu0 0.0
        %768 = vmatpush1.msra.mxu0 0.0
        %769 = vmatprep.subr.mxu0 0.0
        %770 = vmatpush1.msra.mxu0 0.0
        %771 = vmatprep.subr.mxu0 0.0
        %772 = vmatpush1.msra.mxu0 0.0
        %773 = vmatprep.subr.mxu0 0.0
        %774 = vmatpush1.msra.mxu0 0.0
        %775 = vmatprep.subr.mxu0 0.0
        %776 = vmatpush1.msra.mxu0 0.0
        %777 = vmatprep.subr.mxu0 0.0
        %778 = vmatpush1.msra.mxu0 0.0
        %779 = vmatprep.subr.mxu0 0.0
        %780 = vmatpush1.msra.mxu0 0.0
        %781 = vmatprep.subr.mxu0 0.0
        %782 = vmatpush1.msra.mxu0 0.0
        %783 = vmatprep.subr.mxu0 0.0
        %784 = vmatpush1.msra.mxu0 0.0
        %785 = vmatprep.subr.mxu0 0.0
        %786 = vmatpush1.msra.mxu0 0.0
        %787 = vmatprep.subr.mxu0 0.0
        %788 = vmatpush1.msra.mxu0 0.0
        %789 = vmatprep.mubr.f32.mxu0 0.0
        %v790 = vand.u32 %v670, 4294901760
        %v791 = vsub.f32 %v670, %v790
        %v792 = vand.u32 %v791, 4294901760
        %v793 = vsub.f32 %v791, %v792
        %v794 = vand.u32 %v793, 4294901760
        %795 = vmatmul.mubr.f32.gmra.mrb[0].mxu0 %v794
        %v796 = vpop.f32.mrb[0].mxu0
        %v797 = vadd.f32 %v707, %v796
        %v798 = vpop.f32.mrb[0].mxu0
        %799 = vmatprep.mubr.f32.mxu0 0.0
        %v800 = vand.u32 %v671, 4294901760
        %v801 = vsub.f32 %v671, %v800
        %v802 = vand.u32 %v801, 4294901760
        %v803 = vsub.f32 %v801, %v802
        %v804 = vand.u32 %v803, 4294901760
        %805 = vmatmul.mubr.f32.gmra.mrb[0].mxu0 %v804
        %v806 = vpop.f32.mrb[0].mxu0
        %v807 = vadd.f32 %v707, %v806
        %v808 = vpop.f32.mrb[0].mxu0
        %809 = vmatprep.mubr.f32.mxu0 0.0
        %v810 = vand.u32 %v672, 4294901760
        %v811 = vsub.f32 %v672, %v810
        %v812 = vand.u32 %v811, 4294901760
        %v813 = vsub.f32 %v811, %v812
        %v814 = vand.u32 %v813, 4294901760
        %815 = vmatmul.mubr.f32.gmra.mrb[0].mxu0 %v814
        %v816 = vpop.f32.mrb[0].mxu0
        %v817 = vadd.f32 %v707, %v816
        %v818 = vpop.f32.mrb[0].mxu0
        %819 = vmatprep.mubr.f32.mxu0 0.0
        %v820 = vand.u32 %v673, 4294901760
        %v821 = vsub.f32 %v673, %v820
        %v822 = vand.u32 %v821, 4294901760
        %v823 = vsub.f32 %v821, %v822
        %v824 = vand.u32 %v823, 4294901760
        %825 = vmatmul.mubr.f32.gmra.mrb[0].mxu0 %v824
        %v826 = vpop.f32.mrb[0].mxu0
        %v827 = vadd.f32 %v707, %v826
        %v828 = vpop.f32.mrb[0].mxu0
        %829 = vmatprep.mubr.f32.mxu0 0.0
        %v830 = vand.u32 %v674, 4294901760
        %v831 = vsub.f32 %v674, %v830
        %v832 = vand.u32 %v831, 4294901760
        %v833 = vsub.f32 %v831, %v832
        %v834 = vand.u32 %v833, 4294901760
        %835 = vmatmul.mubr.f32.gmra.mrb[0].mxu0 %v834
        %v836 = vpop.f32.mrb[0].mxu0
        %v837 = vadd.f32 %v707, %v836
        %v838 = vpop.f32.mrb[0].mxu0
        %839 = vmatprep.mubr.f32.mxu0 0.0
        %v840 = vand.u32 %v675, 4294901760
        %v841 = vsub.f32 %v675, %v840
        %v842 = vand.u32 %v841, 4294901760
        %v843 = vsub.f32 %v841, %v842
        %v844 = vand.u32 %v843, 4294901760
        %845 = vmatmul.mubr.f32.gmra.mrb[0].mxu0 %v844
        %v846 = vpop.f32.mrb[0].mxu0
        %v847 = vadd.f32 %v707, %v846
        %v848 = vpop.f32.mrb[0].mxu0
        %849 = vmatprep.mubr.f32.mxu0 0.0
        %v850 = vand.u32 %v676, 4294901760
        %v851 = vsub.f32 %v676, %v850
        %v852 = vand.u32 %v851, 4294901760
        %v853 = vsub.f32 %v851, %v852
        %v854 = vand.u32 %v853, 4294901760
        %855 = vmatmul.mubr.f32.gmra.mrb[0].mxu0 %v854
        %v856 = vpop.f32.mrb[0].mxu0
        %v857 = vadd.f32 %v707, %v856
        %v858 = vpop.f32.mrb[0].mxu0
        %859 = vmatprep.mubr.f32.mxu0 0.0
        %v860 = vand.u32 %v677, 4294901760
        %v861 = vsub.f32 %v677, %v860
        %v862 = vand.u32 %v861, 4294901760
        %v863 = vsub.f32 %v861, %v862
        %v864 = vand.u32 %v863, 4294901760
        %865 = vmatmul.mubr.f32.gmra.mrb[0].mxu0 %v864
        %v866 = vpop.f32.mrb[0].mxu0
        %v867 = vadd.f32 %v707, %v866
        %v868 = vpop.f32.mrb[0].mxu0
        %869 = vmatprep.mubr.f32.mxu0 0.0
        %v870 = vand.u32 %v678, 4294901760
        %v871 = vsub.f32 %v678, %v870
        %v872 = vand.u32 %v871, 4294901760
        %v873 = vsub.f32 %v871, %v872
        %v874 = vand.u32 %v873, 4294901760
        %875 = vmatmul.mubr.f32.gmra.mrb[0].mxu0 %v874
        %v876 = vpop.f32.mrb[0].mxu0
        %v877 = vadd.f32 %v707, %v876
        %v878 = vpop.f32.mrb[0].mxu0
        %879 = vmatprep.mubr.f32.mxu0 0.0
        %v880 = vand.u32 %v679, 4294901760
        %v881 = vsub.f32 %v679, %v880
        %v882 = vand.u32 %v881, 4294901760
        %v883 = vsub.f32 %v881, %v882
        %v884 = vand.u32 %v883, 4294901760
        %885 = vmatmul.mubr.f32.gmra.mrb[0].mxu0 %v884
        %v886 = vpop.f32.mrb[0].mxu0
        %v887 = vadd.f32 %v707, %v886
        %v888 = vpop.f32.mrb[0].mxu0
        %889 = vmatprep.mubr.f32.mxu0 0.0
        %v890 = vand.u32 %v680, 4294901760
        %v891 = vsub.f32 %v680, %v890
        %v892 = vand.u32 %v891, 4294901760
        %v893 = vsub.f32 %v891, %v892
        %v894 = vand.u32 %v893, 4294901760
        %895 = vmatmul.mubr.f32.gmra.mrb[0].mxu0 %v894
        %v896 = vpop.f32.mrb[0].mxu0
        %v897 = vadd.f32 %v707, %v896
        %v898 = vpop.f32.mrb[0].mxu0
        %899 = vmatprep.mubr.f32.mxu0 0.0
        %v900 = vand.u32 %v681, 4294901760
        %v901 = vsub.f32 %v681, %v900
        %v902 = vand.u32 %v901, 4294901760
        %v903 = vsub.f32 %v901, %v902
        %v904 = vand.u32 %v903, 4294901760
        %905 = vmatmul.mubr.f32.gmra.mrb[0].mxu0 %v904
        %v906 = vpop.f32.mrb[0].mxu0
        %v907 = vadd.f32 %v707, %v906
        %v908 = vpop.f32.mrb[0].mxu0
        %909 = vmatprep.mubr.f32.mxu0 0.0
        %v910 = vand.u32 %v682, 4294901760
        %v911 = vsub.f32 %v682, %v910
        %v912 = vand.u32 %v911, 4294901760
        %v913 = vsub.f32 %v911, %v912
        %v914 = vand.u32 %v913, 4294901760
        %915 = vmatmul.mubr.f32.gmra.mrb[0].mxu0 %v914
        %v916 = vpop.f32.mrb[0].mxu0
        %v917 = vadd.f32 %v707, %v916
        %v918 = vpop.f32.mrb[0].mxu0
        %919 = vmatprep.mubr.f32.mxu0 0.0
        %v920 = vand.u32 %v683, 4294901760
        %v921 = vsub.f32 %v683, %v920
        %v922 = vand.u32 %v921, 4294901760
        %v923 = vsub.f32 %v921, %v922
        %v924 = vand.u32 %v923, 4294901760
        %925 = vmatmul.mubr.f32.gmra.mrb[0].mxu0 %v924
        %v926 = vpop.f32.mrb[0].mxu0
        %v927 = vadd.f32 %v707, %v926
        %v928 = vpop.f32.mrb[0].mxu0
        %929 = vmatprep.mubr.f32.mxu0 0.0
        %v930 = vand.u32 %v684, 4294901760
        %v931 = vsub.f32 %v684, %v930
        %v932 = vand.u32 %v931, 4294901760
        %v933 = vsub.f32 %v931, %v932
        %v934 = vand.u32 %v933, 4294901760
        %935 = vmatmul.mubr.f32.gmra.mrb[0].mxu0 %v934
        %v936 = vpop.f32.mrb[0].mxu0
        %v937 = vadd.f32 %v707, %v936
        %v938 = vpop.f32.mrb[0].mxu0
        %939 = vmatprep.mubr.f32.mxu0 0.0
        %v940 = vand.u32 %v685, 4294901760
        %v941 = vsub.f32 %v685, %v940
        %v942 = vand.u32 %v941, 4294901760
        %v943 = vsub.f32 %v941, %v942
        %v944 = vand.u32 %v943, 4294901760
        %945 = vmatmul.mubr.f32.gmra.mrb[0].mxu0 %v944
        %v946 = vpop.f32.mrb[0].mxu0
        %v947 = vadd.f32 %v707, %v946
        %v948 = vpop.f32.mrb[0].mxu0
        %949 = vdwg.mxu0
        %950 = vmatprep.subr.mxu0 0.0
        %v951 = vand.u32 %v686, 4294901760
        %v952 = vsub.f32 %v686, %v951
        %v953 = vand.u32 %v952, 4294901760
        %v954 = vsub.f32 %v952, %v953
        %v955 = vand.u32 %v954, 4294901760
        %956 = vmatpush1.msra.mxu0 %v955
        %957 = vmatprep.subr.mxu0 0.0
        %v958 = vand.u32 %v687, 4294901760
        %v959 = vsub.f32 %v687, %v958
        %v960 = vand.u32 %v959, 4294901760
        %v961 = vsub.f32 %v959, %v960
        %v962 = vand.u32 %v961, 4294901760
        %963 = vmatpush1.msra.mxu0 %v962
        %964 = vmatprep.subr.mxu0 0.0
        %v965 = vand.u32 %v688, 4294901760
        %v966 = vsub.f32 %v688, %v965
        %v967 = vand.u32 %v966, 4294901760
        %v968 = vsub.f32 %v966, %v967
        %v969 = vand.u32 %v968, 4294901760
        %970 = vmatpush1.msra.mxu0 %v969
        %971 = vmatprep.subr.mxu0 0.0
        %v972 = vand.u32 %v689, 4294901760
        %v973 = vsub.f32 %v689, %v972
        %v974 = vand.u32 %v973, 4294901760
        %v975 = vsub.f32 %v973, %v974
        %v976 = vand.u32 %v975, 4294901760
        %977 = vmatpush1.msra.mxu0 %v976
        %978 = vmatprep.subr.mxu0 0.0
        %v979 = vand.u32 %v690, 4294901760
        %v980 = vsub.f32 %v690, %v979
        %v981 = vand.u32 %v980, 4294901760
        %v982 = vsub.f32 %v980, %v981
        %v983 = vand.u32 %v982, 4294901760
        %984 = vmatpush1.msra.mxu0 %v983
        %985 = vmatprep.subr.mxu0 0.0
        %v986 = vand.u32 %v691, 4294901760
        %v987 = vsub.f32 %v691, %v986
        %v988 = vand.u32 %v987, 4294901760
        %v989 = vsub.f32 %v987, %v988
        %v990 = vand.u32 %v989, 4294901760
        %991 = vmatpush1.msra.mxu0 %v990
        %992 = vmatprep.subr.mxu0 0.0
        %v993 = vand.u32 %v692, 4294901760
        %v994 = vsub.f32 %v692, %v993
        %v995 = vand.u32 %v994, 4294901760
        %v996 = vsub.f32 %v994, %v995
        %v997 = vand.u32 %v996, 4294901760
        %998 = vmatpush1.msra.mxu0 %v997
        %999 = vmatprep.subr.mxu0 0.0
        %v1000 = vand.u32 %v693, 4294901760
        %v1001 = vsub.f32 %v693, %v1000
        %v1002 = vand.u32 %v1001, 4294901760
        %v1003 = vsub.f32 %v1001, %v1002
        %v1004 = vand.u32 %v1003, 4294901760
        %1005 = vmatpush1.msra.mxu0 %v1004
        %1006 = vmatprep.subr.mxu0 0.0
        %v1007 = vand.u32 %v694, 4294901760
        %v1008 = vsub.f32 %v694, %v1007
        %v1009 = vand.u32 %v1008, 4294901760
        %v1010 = vsub.f32 %v1008, %v1009
        %v1011 = vand.u32 %v1010, 4294901760
        %1012 = vmatpush1.msra.mxu0 %v1011
        %1013 = vmatprep.subr.mxu0 0.0
        %v1014 = vand.u32 %v695, 4294901760
        %v1015 = vsub.f32 %v695, %v1014
        %v1016 = vand.u32 %v1015, 4294901760
        %v1017 = vsub.f32 %v1015, %v1016
        %v1018 = vand.u32 %v1017, 4294901760
        %1019 = vmatpush1.msra.mxu0 %v1018
        %1020 = vmatprep.subr.mxu0 0.0
        %v1021 = vand.u32 %v696, 4294901760
        %v1022 = vsub.f32 %v696, %v1021
        %v1023 = vand.u32 %v1022, 4294901760
        %v1024 = vsub.f32 %v1022, %v1023
        %v1025 = vand.u32 %v1024, 4294901760
        %1026 = vmatpush1.msra.mxu0 %v1025
        %1027 = vmatprep.subr.mxu0 0.0
        %v1028 = vand.u32 %v697, 4294901760
        %v1029 = vsub.f32 %v697, %v1028
        %v1030 = vand.u32 %v1029, 4294901760
        %v1031 = vsub.f32 %v1029, %v1030
        %v1032 = vand.u32 %v1031, 4294901760
        %1033 = vmatpush1.msra.mxu0 %v1032
        %1034 = vmatprep.subr.mxu0 0.0
        %v1035 = vand.u32 %v698, 4294901760
        %v1036 = vsub.f32 %v698, %v1035
        %v1037 = vand.u32 %v1036, 4294901760
        %v1038 = vsub.f32 %v1036, %v1037
        %v1039 = vand.u32 %v1038, 4294901760
        %1040 = vmatpush1.msra.mxu0 %v1039
        %1041 = vmatprep.subr.mxu0 0.0
        %v1042 = vand.u32 %v699, 4294901760
        %v1043 = vsub.f32 %v699, %v1042
        %v1044 = vand.u32 %v1043, 4294901760
        %v1045 = vsub.f32 %v1043, %v1044
        %v1046 = vand.u32 %v1045, 4294901760
        %1047 = vmatpush1.msra.mxu0 %v1046
        %1048 = vmatprep.subr.mxu0 0.0
        %v1049 = vand.u32 %v700, 4294901760
        %v1050 = vsub.f32 %v700, %v1049
        %v1051 = vand.u32 %v1050, 4294901760
        %v1052 = vsub.f32 %v1050, %v1051
        %v1053 = vand.u32 %v1052, 4294901760
        %1054 = vmatpush1.msra.mxu0 %v1053
        %1055 = vmatprep.subr.mxu0 0.0
        %v1056 = vand.u32 %v701, 4294901760
        %v1057 = vsub.f32 %v701, %v1056
        %v1058 = vand.u32 %v1057, 4294901760
        %v1059 = vsub.f32 %v1057, %v1058
        %v1060 = vand.u32 %v1059, 4294901760
        %1061 = vmatpush1.msra.mxu0 %v1060
        %1062 = vmatprep.subr.mxu0 0.0
        %1063 = vmatpush1.msra.mxu0 0.0
        %1064 = vmatprep.subr.mxu0 0.0
        %1065 = vmatpush1.msra.mxu0 0.0
        %1066 = vmatprep.subr.mxu0 0.0
        %1067 = vmatpush1.msra.mxu0 0.0
        %1068 = vmatprep.subr.mxu0 0.0
        %1069 = vmatpush1.msra.mxu0 0.0
        %1070 = vmatprep.subr.mxu0 0.0
        %1071 = vmatpush1.msra.mxu0 0.0
        %1072 = vmatprep.subr.mxu0 0.0
        %1073 = vmatpush1.msra.mxu0 0.0
        %1074 = vmatprep.subr.mxu0 0.0
        %1075 = vmatpush1.msra.mxu0 0.0
        %1076 = vmatprep.subr.mxu0 0.0
        %1077 = vmatpush1.msra.mxu0 0.0
        %1078 = vmatprep.subr.mxu0 0.0
        %1079 = vmatpush1.msra.mxu0 0.0
        %1080 = vmatprep.subr.mxu0 0.0
        %1081 = vmatpush1.msra.mxu0 0.0
        %1082 = vmatprep.subr.mxu0 0.0
        %1083 = vmatpush1.msra.mxu0 0.0
        %1084 = vmatprep.subr.mxu0 0.0
        %1085 = vmatpush1.msra.mxu0 0.0
        %1086 = vmatprep.subr.mxu0 0.0
        %1087 = vmatpush1.msra.mxu0 0.0
        %1088 = vmatprep.subr.mxu0 0.0
        %1089 = vmatpush1.msra.mxu0 0.0
        %1090 = vmatprep.subr.mxu0 0.0
        %1091 = vmatpush1.msra.mxu0 0.0
        %1092 = vmatprep.subr.mxu0 0.0
        %1093 = vmatpush1.msra.mxu0 0.0
        %1094 = vmatprep.mubr.f32.mxu0 0.0
        %v1095 = vand.u32 %v670, 4294901760
        %1096 = vmatmul.mubr.f32.gmra.mrb[0].mxu0 %v1095
        %v1097 = vpop.f32.mrb[0].mxu0
        %v1098 = vadd.f32 %v797, %v1097
        %v1099 = vpop.f32.mrb[0].mxu0
        %1100 = vmatprep.mubr.f32.mxu0 0.0
        %v1101 = vand.u32 %v671, 4294901760
        %1102 = vmatmul.mubr.f32.gmra.mrb[0].mxu0 %v1101
        %v1103 = vpop.f32.mrb[0].mxu0
        %v1104 = vadd.f32 %v807, %v1103
        %v1105 = vpop.f32.mrb[0].mxu0
        %1106 = vmatprep.mubr.f32.mxu0 0.0
        %v1107 = vand.u32 %v672, 4294901760
        %1108 = vmatmul.mubr.f32.gmra.mrb[0].mxu0 %v1107
        %v1109 = vpop.f32.mrb[0].mxu0
        %v1110 = vadd.f32 %v817, %v1109
        %v1111 = vpop.f32.mrb[0].mxu0
        %1112 = vmatprep.mubr.f32.mxu0 0.0
        %v1113 = vand.u32 %v673, 4294901760
        %1114 = vmatmul.mubr.f32.gmra.mrb[0].mxu0 %v1113
        %v1115 = vpop.f32.mrb[0].mxu0
        %v1116 = vadd.f32 %v827, %v1115
        %v1117 = vpop.f32.mrb[0].mxu0
        %1118 = vmatprep.mubr.f32.mxu0 0.0
        %v1119 = vand.u32 %v674, 4294901760
        %1120 = vmatmul.mubr.f32.gmra.mrb[0].mxu0 %v1119
        %v1121 = vpop.f32.mrb[0].mxu0
        %v1122 = vadd.f32 %v837, %v1121
        %v1123 = vpop.f32.mrb[0].mxu0
        %1124 = vmatprep.mubr.f32.mxu0 0.0
        %v1125 = vand.u32 %v675, 4294901760
        %1126 = vmatmul.mubr.f32.gmra.mrb[0].mxu0 %v1125
        %v1127 = vpop.f32.mrb[0].mxu0
        %v1128 = vadd.f32 %v847, %v1127
        %v1129 = vpop.f32.mrb[0].mxu0
        %1130 = vmatprep.mubr.f32.mxu0 0.0
        %v1131 = vand.u32 %v676, 4294901760
        %1132 = vmatmul.mubr.f32.gmra.mrb[0].mxu0 %v1131
        %v1133 = vpop.f32.mrb[0].mxu0
        %v1134 = vadd.f32 %v857, %v1133
        %v1135 = vpop.f32.mrb[0].mxu0
        %1136 = vmatprep.mubr.f32.mxu0 0.0
        %v1137 = vand.u32 %v677, 4294901760
        %1138 = vmatmul.mubr.f32.gmra.mrb[0].mxu0 %v1137
        %v1139 = vpop.f32.mrb[0].mxu0
        %v1140 = vadd.f32 %v867, %v1139
        %v1141 = vpop.f32.mrb[0].mxu0
        %1142 = vmatprep.mubr.f32.mxu0 0.0
        %v1143 = vand.u32 %v678, 4294901760
        %1144 = vmatmul.mubr.f32.gmra.mrb[0].mxu0 %v1143
        %v1145 = vpop.f32.mrb[0].mxu0
        %v1146 = vadd.f32 %v877, %v1145
        %v1147 = vpop.f32.mrb[0].mxu0
        %1148 = vmatprep.mubr.f32.mxu0 0.0
        %v1149 = vand.u32 %v679, 4294901760
        %1150 = vmatmul.mubr.f32.gmra.mrb[0].mxu0 %v1149
        %v1151 = vpop.f32.mrb[0].mxu0
        %v1152 = vadd.f32 %v887, %v1151
        %v1153 = vpop.f32.mrb[0].mxu0
        %1154 = vmatprep.mubr.f32.mxu0 0.0
        %v1155 = vand.u32 %v680, 4294901760
        %1156 = vmatmul.mubr.f32.gmra.mrb[0].mxu0 %v1155
        %v1157 = vpop.f32.mrb[0].mxu0
        %v1158 = vadd.f32 %v897, %v1157
        %v1159 = vpop.f32.mrb[0].mxu0
        %1160 = vmatprep.mubr.f32.mxu0 0.0
        %v1161 = vand.u32 %v681, 4294901760
        %1162 = vmatmul.mubr.f32.gmra.mrb[0].mxu0 %v1161
        %v1163 = vpop.f32.mrb[0].mxu0
        %v1164 = vadd.f32 %v907, %v1163
        %v1165 = vpop.f32.mrb[0].mxu0
        %1166 = vmatprep.mubr.f32.mxu0 0.0
        %v1167 = vand.u32 %v682, 4294901760
        %1168 = vmatmul.mubr.f32.gmra.mrb[0].mxu0 %v1167
        %v1169 = vpop.f32.mrb[0].mxu0
        %v1170 = vadd.f32 %v917, %v1169
        %v1171 = vpop.f32.mrb[0].mxu0
        %1172 = vmatprep.mubr.f32.mxu0 0.0
        %v1173 = vand.u32 %v683, 4294901760
        %1174 = vmatmul.mubr.f32.gmra.mrb[0].mxu0 %v1173
        %v1175 = vpop.f32.mrb[0].mxu0
        %v1176 = vadd.f32 %v927, %v1175
        %v1177 = vpop.f32.mrb[0].mxu0
        %1178 = vmatprep.mubr.f32.mxu0 0.0
        %v1179 = vand.u32 %v684, 4294901760
        %1180 = vmatmul.mubr.f32.gmra.mrb[0].mxu0 %v1179
        %v1181 = vpop.f32.mrb[0].mxu0
        %v1182 = vadd.f32 %v937, %v1181
        %v1183 = vpop.f32.mrb[0].mxu0
        %1184 = vmatprep.mubr.f32.mxu0 0.0
        %v1185 = vand.u32 %v685, 4294901760
        %1186 = vmatmul.mubr.f32.gmra.mrb[0].mxu0 %v1185
        %v1187 = vpop.f32.mrb[0].mxu0
        %v1188 = vadd.f32 %v947, %v1187
        %v1189 = vpop.f32.mrb[0].mxu0
        %1190 = vdwg.mxu0
        %1191 = vmatprep.subr.mxu0 0.0
        %v1192 = vand.u32 %v686, 4294901760
        %v1193 = vsub.f32 %v686, %v1192
        %1194 = vmatpush1.msra.mxu0 %v1193
        %1195 = vmatprep.subr.mxu0 0.0
        %v1196 = vand.u32 %v687, 4294901760
        %v1197 = vsub.f32 %v687, %v1196
        %1198 = vmatpush1.msra.mxu0 %v1197
        %1199 = vmatprep.subr.mxu0 0.0
        %v1200 = vand.u32 %v688, 4294901760
        %v1201 = vsub.f32 %v688, %v1200
        %1202 = vmatpush1.msra.mxu0 %v1201
        %1203 = vmatprep.subr.mxu0 0.0
        %v1204 = vand.u32 %v689, 4294901760
        %v1205 = vsub.f32 %v689, %v1204
        %1206 = vmatpush1.msra.mxu0 %v1205
        %1207 = vmatprep.subr.mxu0 0.0
        %v1208 = vand.u32 %v690, 4294901760
        %v1209 = vsub.f32 %v690, %v1208
        %1210 = vmatpush1.msra.mxu0 %v1209
        %1211 = vmatprep.subr.mxu0 0.0
        %v1212 = vand.u32 %v691, 4294901760
        %v1213 = vsub.f32 %v691, %v1212
        %1214 = vmatpush1.msra.mxu0 %v1213
        %1215 = vmatprep.subr.mxu0 0.0
        %v1216 = vand.u32 %v692, 4294901760
        %v1217 = vsub.f32 %v692, %v1216
        %1218 = vmatpush1.msra.mxu0 %v1217
        %1219 = vmatprep.subr.mxu0 0.0
        %v1220 = vand.u32 %v693, 4294901760
        %v1221 = vsub.f32 %v693, %v1220
        %1222 = vmatpush1.msra.mxu0 %v1221
        %1223 = vmatprep.subr.mxu0 0.0
        %v1224 = vand.u32 %v694, 4294901760
        %v1225 = vsub.f32 %v694, %v1224
        %1226 = vmatpush1.msra.mxu0 %v1225
        %1227 = vmatprep.subr.mxu0 0.0
        %v1228 = vand.u32 %v695, 4294901760
        %v1229 = vsub.f32 %v695, %v1228
        %1230 = vmatpush1.msra.mxu0 %v1229
        %1231 = vmatprep.subr.mxu0 0.0
        %v1232 = vand.u32 %v696, 4294901760
        %v1233 = vsub.f32 %v696, %v1232
        %1234 = vmatpush1.msra.mxu0 %v1233
        %1235 = vmatprep.subr.mxu0 0.0
        %v1236 = vand.u32 %v697, 4294901760
        %v1237 = vsub.f32 %v697, %v1236
        %1238 = vmatpush1.msra.mxu0 %v1237
        %1239 = vmatprep.subr.mxu0 0.0
        %v1240 = vand.u32 %v698, 4294901760
        %v1241 = vsub.f32 %v698, %v1240
        %1242 = vmatpush1.msra.mxu0 %v1241
        %1243 = vmatprep.subr.mxu0 0.0
        %v1244 = vand.u32 %v699, 4294901760
        %v1245 = vsub.f32 %v699, %v1244
        %1246 = vmatpush1.msra.mxu0 %v1245
        %1247 = vmatprep.subr.mxu0 0.0
        %v1248 = vand.u32 %v700, 4294901760
        %v1249 = vsub.f32 %v700, %v1248
        %1250 = vmatpush1.msra.mxu0 %v1249
        %1251 = vmatprep.subr.mxu0 0.0
        %v1252 = vand.u32 %v701, 4294901760
        %v1253 = vsub.f32 %v701, %v1252
        %1254 = vmatpush1.msra.mxu0 %v1253
        %1255 = vmatprep.subr.mxu0 0.0
        %1256 = vmatpush1.msra.mxu0 0.0
        %1257 = vmatprep.subr.mxu0 0.0
        %1258 = vmatpush1.msra.mxu0 0.0
        %1259 = vmatprep.subr.mxu0 0.0
        %1260 = vmatpush1.msra.mxu0 0.0
        %1261 = vmatprep.subr.mxu0 0.0
        %1262 = vmatpush1.msra.mxu0 0.0
        %1263 = vmatprep.subr.mxu0 0.0
        %1264 = vmatpush1.msra.mxu0 0.0
        %1265 = vmatprep.subr.mxu0 0.0
        %1266 = vmatpush1.msra.mxu0 0.0
        %1267 = vmatprep.subr.mxu0 0.0
        %1268 = vmatpush1.msra.mxu0 0.0
        %1269 = vmatprep.subr.mxu0 0.0
        %1270 = vmatpush1.msra.mxu0 0.0
        %1271 = vmatprep.subr.mxu0 0.0
        %1272 = vmatpush1.msra.mxu0 0.0
        %1273 = vmatprep.subr.mxu0 0.0
        %1274 = vmatpush1.msra.mxu0 0.0
        %1275 = vmatprep.subr.mxu0 0.0
        %1276 = vmatpush1.msra.mxu0 0.0
        %1277 = vmatprep.subr.mxu0 0.0
        %1278 = vmatpush1.msra.mxu0 0.0
        %1279 = vmatprep.subr.mxu0 0.0
        %1280 = vmatpush1.msra.mxu0 0.0
        %1281 = vmatprep.subr.mxu0 0.0
        %1282 = vmatpush1.msra.mxu0 0.0
        %1283 = vmatprep.subr.mxu0 0.0
        %1284 = vmatpush1.msra.mxu0 0.0
        %1285 = vmatprep.subr.mxu0 0.0
        %1286 = vmatpush1.msra.mxu0 0.0
        %1287 = vmatprep.mubr.f32.mxu0 0.0
        %v1288 = vand.u32 %v670, 4294901760
        %v1289 = vsub.f32 %v670, %v1288
        %1290 = vmatmul.mubr.f32.gmra.mrb[0].mxu0 %v1289
        %v1291 = vpop.f32.mrb[0].mxu0
        %v1292 = vadd.f32 %v1098, %v1291
        %v1293 = vpop.f32.mrb[0].mxu0
        %1294 = vmatprep.mubr.f32.mxu0 0.0
        %v1295 = vand.u32 %v671, 4294901760
        %v1296 = vsub.f32 %v671, %v1295
        %1297 = vmatmul.mubr.f32.gmra.mrb[0].mxu0 %v1296
        %v1298 = vpop.f32.mrb[0].mxu0
        %v1299 = vadd.f32 %v1104, %v1298
        %v1300 = vpop.f32.mrb[0].mxu0
        %1301 = vmatprep.mubr.f32.mxu0 0.0
        %v1302 = vand.u32 %v672, 4294901760
        %v1303 = vsub.f32 %v672, %v1302
        %1304 = vmatmul.mubr.f32.gmra.mrb[0].mxu0 %v1303
        %v1305 = vpop.f32.mrb[0].mxu0
        %v1306 = vadd.f32 %v1110, %v1305
        %v1307 = vpop.f32.mrb[0].mxu0
        %1308 = vmatprep.mubr.f32.mxu0 0.0
        %v1309 = vand.u32 %v673, 4294901760
        %v1310 = vsub.f32 %v673, %v1309
        %1311 = vmatmul.mubr.f32.gmra.mrb[0].mxu0 %v1310
        %v1312 = vpop.f32.mrb[0].mxu0
        %v1313 = vadd.f32 %v1116, %v1312
        %v1314 = vpop.f32.mrb[0].mxu0
        %1315 = vmatprep.mubr.f32.mxu0 0.0
        %v1316 = vand.u32 %v674, 4294901760
        %v1317 = vsub.f32 %v674, %v1316
        %1318 = vmatmul.mubr.f32.gmra.mrb[0].mxu0 %v1317
        %v1319 = vpop.f32.mrb[0].mxu0
        %v1320 = vadd.f32 %v1122, %v1319
        %v1321 = vpop.f32.mrb[0].mxu0
        %1322 = vmatprep.mubr.f32.mxu0 0.0
        %v1323 = vand.u32 %v675, 4294901760
        %v1324 = vsub.f32 %v675, %v1323
        %1325 = vmatmul.mubr.f32.gmra.mrb[0].mxu0 %v1324
        %v1326 = vpop.f32.mrb[0].mxu0
        %v1327 = vadd.f32 %v1128, %v1326
        %v1328 = vpop.f32.mrb[0].mxu0
        %1329 = vmatprep.mubr.f32.mxu0 0.0
        %v1330 = vand.u32 %v676, 4294901760
        %v1331 = vsub.f32 %v676, %v1330
        %1332 = vmatmul.mubr.f32.gmra.mrb[0].mxu0 %v1331
        %v1333 = vpop.f32.mrb[0].mxu0
        %v1334 = vadd.f32 %v1134, %v1333
        %v1335 = vpop.f32.mrb[0].mxu0
        %1336 = vmatprep.mubr.f32.mxu0 0.0
        %v1337 = vand.u32 %v677, 4294901760
        %v1338 = vsub.f32 %v677, %v1337
        %1339 = vmatmul.mubr.f32.gmra.mrb[0].mxu0 %v1338
        %v1340 = vpop.f32.mrb[0].mxu0
        %v1341 = vadd.f32 %v1140, %v1340
        %v1342 = vpop.f32.mrb[0].mxu0
        %1343 = vmatprep.mubr.f32.mxu0 0.0
        %v1344 = vand.u32 %v678, 4294901760
        %v1345 = vsub.f32 %v678, %v1344
        %1346 = vmatmul.mubr.f32.gmra.mrb[0].mxu0 %v1345
        %v1347 = vpop.f32.mrb[0].mxu0
        %v1348 = vadd.f32 %v1146, %v1347
        %v1349 = vpop.f32.mrb[0].mxu0
        %1350 = vmatprep.mubr.f32.mxu0 0.0
        %v1351 = vand.u32 %v679, 4294901760
        %v1352 = vsub.f32 %v679, %v1351
        %1353 = vmatmul.mubr.f32.gmra.mrb[0].mxu0 %v1352
        %v1354 = vpop.f32.mrb[0].mxu0
        %v1355 = vadd.f32 %v1152, %v1354
        %v1356 = vpop.f32.mrb[0].mxu0
        %1357 = vmatprep.mubr.f32.mxu0 0.0
        %v1358 = vand.u32 %v680, 4294901760
        %v1359 = vsub.f32 %v680, %v1358
        %1360 = vmatmul.mubr.f32.gmra.mrb[0].mxu0 %v1359
        %v1361 = vpop.f32.mrb[0].mxu0
        %v1362 = vadd.f32 %v1158, %v1361
        %v1363 = vpop.f32.mrb[0].mxu0
        %1364 = vmatprep.mubr.f32.mxu0 0.0
        %v1365 = vand.u32 %v681, 4294901760
        %v1366 = vsub.f32 %v681, %v1365
        %1367 = vmatmul.mubr.f32.gmra.mrb[0].mxu0 %v1366
        %v1368 = vpop.f32.mrb[0].mxu0
        %v1369 = vadd.f32 %v1164, %v1368
        %v1370 = vpop.f32.mrb[0].mxu0
        %1371 = vmatprep.mubr.f32.mxu0 0.0
        %v1372 = vand.u32 %v682, 4294901760
        %v1373 = vsub.f32 %v682, %v1372
        %1374 = vmatmul.mubr.f32.gmra.mrb[0].mxu0 %v1373
        %v1375 = vpop.f32.mrb[0].mxu0
        %v1376 = vadd.f32 %v1170, %v1375
        %v1377 = vpop.f32.mrb[0].mxu0
        %1378 = vmatprep.mubr.f32.mxu0 0.0
        %v1379 = vand.u32 %v683, 4294901760
        %v1380 = vsub.f32 %v683, %v1379
        %1381 = vmatmul.mubr.f32.gmra.mrb[0].mxu0 %v1380
        %v1382 = vpop.f32.mrb[0].mxu0
        %v1383 = vadd.f32 %v1176, %v1382
        %v1384 = vpop.f32.mrb[0].mxu0
        %1385 = vmatprep.mubr.f32.mxu0 0.0
        %v1386 = vand.u32 %v684, 4294901760
        %v1387 = vsub.f32 %v684, %v1386
        %1388 = vmatmul.mubr.f32.gmra.mrb[0].mxu0 %v1387
        %v1389 = vpop.f32.mrb[0].mxu0
        %v1390 = vadd.f32 %v1182, %v1389
        %v1391 = vpop.f32.mrb[0].mxu0
        %1392 = vmatprep.mubr.f32.mxu0 0.0
        %v1393 = vand.u32 %v685, 4294901760
        %v1394 = vsub.f32 %v685, %v1393
        %1395 = vmatmul.mubr.f32.gmra.mrb[0].mxu0 %v1394
        %v1396 = vpop.f32.mrb[0].mxu0
        %v1397 = vadd.f32 %v1188, %v1396
        %v1398 = vpop.f32.mrb[0].mxu0
        %1399 = vdwg.mxu0
        %1400 = vmatprep.subr.mxu0 0.0
        %v1401 = vand.u32 %v686, 4294901760
        %1402 = vmatpush1.msra.mxu0 %v1401
        %1403 = vmatprep.subr.mxu0 0.0
        %v1404 = vand.u32 %v687, 4294901760
        %1405 = vmatpush1.msra.mxu0 %v1404
        %1406 = vmatprep.subr.mxu0 0.0
        %v1407 = vand.u32 %v688, 4294901760
        %1408 = vmatpush1.msra.mxu0 %v1407
        %1409 = vmatprep.subr.mxu0 0.0
        %v1410 = vand.u32 %v689, 4294901760
        %1411 = vmatpush1.msra.mxu0 %v1410
        %1412 = vmatprep.subr.mxu0 0.0
        %v1413 = vand.u32 %v690, 4294901760
        %1414 = vmatpush1.msra.mxu0 %v1413
        %1415 = vmatprep.subr.mxu0 0.0
        %v1416 = vand.u32 %v691, 4294901760
        %1417 = vmatpush1.msra.mxu0 %v1416
        %1418 = vmatprep.subr.mxu0 0.0
        %v1419 = vand.u32 %v692, 4294901760
        %1420 = vmatpush1.msra.mxu0 %v1419
        %1421 = vmatprep.subr.mxu0 0.0
        %v1422 = vand.u32 %v693, 4294901760
        %1423 = vmatpush1.msra.mxu0 %v1422
        %1424 = vmatprep.subr.mxu0 0.0
        %v1425 = vand.u32 %v694, 4294901760
        %1426 = vmatpush1.msra.mxu0 %v1425
        %1427 = vmatprep.subr.mxu0 0.0
        %v1428 = vand.u32 %v695, 4294901760
        %1429 = vmatpush1.msra.mxu0 %v1428
        %1430 = vmatprep.subr.mxu0 0.0
        %v1431 = vand.u32 %v696, 4294901760
        %1432 = vmatpush1.msra.mxu0 %v1431
        %1433 = vmatprep.subr.mxu0 0.0
        %v1434 = vand.u32 %v697, 4294901760
        %1435 = vmatpush1.msra.mxu0 %v1434
        %1436 = vmatprep.subr.mxu0 0.0
        %v1437 = vand.u32 %v698, 4294901760
        %1438 = vmatpush1.msra.mxu0 %v1437
        %1439 = vmatprep.subr.mxu0 0.0
        %v1440 = vand.u32 %v699, 4294901760
        %1441 = vmatpush1.msra.mxu0 %v1440
        %1442 = vmatprep.subr.mxu0 0.0
        %v1443 = vand.u32 %v700, 4294901760
        %1444 = vmatpush1.msra.mxu0 %v1443
        %1445 = vmatprep.subr.mxu0 0.0
        %v1446 = vand.u32 %v701, 4294901760
        %1447 = vmatpush1.msra.mxu0 %v1446
        %1448 = vmatprep.subr.mxu0 0.0
        %1449 = vmatpush1.msra.mxu0 0.0
        %1450 = vmatprep.subr.mxu0 0.0
        %1451 = vmatpush1.msra.mxu0 0.0
        %1452 = vmatprep.subr.mxu0 0.0
        %1453 = vmatpush1.msra.mxu0 0.0
        %1454 = vmatprep.subr.mxu0 0.0
        %1455 = vmatpush1.msra.mxu0 0.0
        %1456 = vmatprep.subr.mxu0 0.0
        %1457 = vmatpush1.msra.mxu0 0.0
        %1458 = vmatprep.subr.mxu0 0.0
        %1459 = vmatpush1.msra.mxu0 0.0
        %1460 = vmatprep.subr.mxu0 0.0
        %1461 = vmatpush1.msra.mxu0 0.0
        %1462 = vmatprep.subr.mxu0 0.0
        %1463 = vmatpush1.msra.mxu0 0.0
        %1464 = vmatprep.subr.mxu0 0.0
        %1465 = vmatpush1.msra.mxu0 0.0
        %1466 = vmatprep.subr.mxu0 0.0
        %1467 = vmatpush1.msra.mxu0 0.0
        %1468 = vmatprep.subr.mxu0 0.0
        %1469 = vmatpush1.msra.mxu0 0.0
        %1470 = vmatprep.subr.mxu0 0.0
        %1471 = vmatpush1.msra.mxu0 0.0
        %1472 = vmatprep.subr.mxu0 0.0
        %1473 = vmatpush1.msra.mxu0 0.0
        %1474 = vmatprep.subr.mxu0 0.0
        %1475 = vmatpush1.msra.mxu0 0.0
        %1476 = vmatprep.subr.mxu0 0.0
        %1477 = vmatpush1.msra.mxu0 0.0
        %1478 = vmatprep.subr.mxu0 0.0
        %1479 = vmatpush1.msra.mxu0 0.0
        %1480 = vmatprep.mubr.f32.mxu0 0.0
        %v1481 = vand.u32 %v670, 4294901760
        %v1482 = vsub.f32 %v670, %v1481
        %v1483 = vand.u32 %v1482, 4294901760
        %1484 = vmatmul.mubr.f32.gmra.mrb[0].mxu0 %v1483
        %v1485 = vpop.f32.mrb[0].mxu0
        %v1486 = vadd.f32 %v1292, %v1485
        %v1487 = vpop.f32.mrb[0].mxu0
        %1488 = vmatprep.mubr.f32.mxu0 0.0
        %v1489 = vand.u32 %v671, 4294901760
        %v1490 = vsub.f32 %v671, %v1489
        %v1491 = vand.u32 %v1490, 4294901760
        %1492 = vmatmul.mubr.f32.gmra.mrb[0].mxu0 %v1491
        %v1493 = vpop.f32.mrb[0].mxu0
        %v1494 = vadd.f32 %v1299, %v1493
        %v1495 = vpop.f32.mrb[0].mxu0
        %1496 = vmatprep.mubr.f32.mxu0 0.0
        %v1497 = vand.u32 %v672, 4294901760
        %v1498 = vsub.f32 %v672, %v1497
        %v1499 = vand.u32 %v1498, 4294901760
        %1500 = vmatmul.mubr.f32.gmra.mrb[0].mxu0 %v1499
        %v1501 = vpop.f32.mrb[0].mxu0
        %v1502 = vadd.f32 %v1306, %v1501
        %v1503 = vpop.f32.mrb[0].mxu0
        %1504 = vmatprep.mubr.f32.mxu0 0.0
        %v1505 = vand.u32 %v673, 4294901760
        %v1506 = vsub.f32 %v673, %v1505
        %v1507 = vand.u32 %v1506, 4294901760
        %1508 = vmatmul.mubr.f32.gmra.mrb[0].mxu0 %v1507
        %v1509 = vpop.f32.mrb[0].mxu0
        %v1510 = vadd.f32 %v1313, %v1509
        %v1511 = vpop.f32.mrb[0].mxu0
        %1512 = vmatprep.mubr.f32.mxu0 0.0
        %v1513 = vand.u32 %v674, 4294901760
        %v1514 = vsub.f32 %v674, %v1513
        %v1515 = vand.u32 %v1514, 4294901760
        %1516 = vmatmul.mubr.f32.gmra.mrb[0].mxu0 %v1515
        %v1517 = vpop.f32.mrb[0].mxu0
        %v1518 = vadd.f32 %v1320, %v1517
        %v1519 = vpop.f32.mrb[0].mxu0
        %1520 = vmatprep.mubr.f32.mxu0 0.0
        %v1521 = vand.u32 %v675, 4294901760
        %v1522 = vsub.f32 %v675, %v1521
        %v1523 = vand.u32 %v1522, 4294901760
        %1524 = vmatmul.mubr.f32.gmra.mrb[0].mxu0 %v1523
        %v1525 = vpop.f32.mrb[0].mxu0
        %v1526 = vadd.f32 %v1327, %v1525
        %v1527 = vpop.f32.mrb[0].mxu0
        %1528 = vmatprep.mubr.f32.mxu0 0.0
        %v1529 = vand.u32 %v676, 4294901760
        %v1530 = vsub.f32 %v676, %v1529
        %v1531 = vand.u32 %v1530, 4294901760
        %1532 = vmatmul.mubr.f32.gmra.mrb[0].mxu0 %v1531
        %v1533 = vpop.f32.mrb[0].mxu0
        %v1534 = vadd.f32 %v1334, %v1533
        %v1535 = vpop.f32.mrb[0].mxu0
        %1536 = vmatprep.mubr.f32.mxu0 0.0
        %v1537 = vand.u32 %v677, 4294901760
        %v1538 = vsub.f32 %v677, %v1537
        %v1539 = vand.u32 %v1538, 4294901760
        %1540 = vmatmul.mubr.f32.gmra.mrb[0].mxu0 %v1539
        %v1541 = vpop.f32.mrb[0].mxu0
        %v1542 = vadd.f32 %v1341, %v1541
        %v1543 = vpop.f32.mrb[0].mxu0
        %1544 = vmatprep.mubr.f32.mxu0 0.0
        %v1545 = vand.u32 %v678, 4294901760
        %v1546 = vsub.f32 %v678, %v1545
        %v1547 = vand.u32 %v1546, 4294901760
        %1548 = vmatmul.mubr.f32.gmra.mrb[0].mxu0 %v1547
        %v1549 = vpop.f32.mrb[0].mxu0
        %v1550 = vadd.f32 %v1348, %v1549
        %v1551 = vpop.f32.mrb[0].mxu0
        %1552 = vmatprep.mubr.f32.mxu0 0.0
        %v1553 = vand.u32 %v679, 4294901760
        %v1554 = vsub.f32 %v679, %v1553
        %v1555 = vand.u32 %v1554, 4294901760
        %1556 = vmatmul.mubr.f32.gmra.mrb[0].mxu0 %v1555
        %v1557 = vpop.f32.mrb[0].mxu0
        %v1558 = vadd.f32 %v1355, %v1557
        %v1559 = vpop.f32.mrb[0].mxu0
        %1560 = vmatprep.mubr.f32.mxu0 0.0
        %v1561 = vand.u32 %v680, 4294901760
        %v1562 = vsub.f32 %v680, %v1561
        %v1563 = vand.u32 %v1562, 4294901760
        %1564 = vmatmul.mubr.f32.gmra.mrb[0].mxu0 %v1563
        %v1565 = vpop.f32.mrb[0].mxu0
        %v1566 = vadd.f32 %v1362, %v1565
        %v1567 = vpop.f32.mrb[0].mxu0
        %1568 = vmatprep.mubr.f32.mxu0 0.0
        %v1569 = vand.u32 %v681, 4294901760
        %v1570 = vsub.f32 %v681, %v1569
        %v1571 = vand.u32 %v1570, 4294901760
        %1572 = vmatmul.mubr.f32.gmra.mrb[0].mxu0 %v1571
        %v1573 = vpop.f32.mrb[0].mxu0
        %v1574 = vadd.f32 %v1369, %v1573
        %v1575 = vpop.f32.mrb[0].mxu0
        %1576 = vmatprep.mubr.f32.mxu0 0.0
        %v1577 = vand.u32 %v682, 4294901760
        %v1578 = vsub.f32 %v682, %v1577
        %v1579 = vand.u32 %v1578, 4294901760
        %1580 = vmatmul.mubr.f32.gmra.mrb[0].mxu0 %v1579
        %v1581 = vpop.f32.mrb[0].mxu0
        %v1582 = vadd.f32 %v1376, %v1581
        %v1583 = vpop.f32.mrb[0].mxu0
        %1584 = vmatprep.mubr.f32.mxu0 0.0
        %v1585 = vand.u32 %v683, 4294901760
        %v1586 = vsub.f32 %v683, %v1585
        %v1587 = vand.u32 %v1586, 4294901760
        %1588 = vmatmul.mubr.f32.gmra.mrb[0].mxu0 %v1587
        %v1589 = vpop.f32.mrb[0].mxu0
        %v1590 = vadd.f32 %v1383, %v1589
        %v1591 = vpop.f32.mrb[0].mxu0
        %1592 = vmatprep.mubr.f32.mxu0 0.0
        %v1593 = vand.u32 %v684, 4294901760
        %v1594 = vsub.f32 %v684, %v1593
        %v1595 = vand.u32 %v1594, 4294901760
        %1596 = vmatmul.mubr.f32.gmra.mrb[0].mxu0 %v1595
        %v1597 = vpop.f32.mrb[0].mxu0
        %v1598 = vadd.f32 %v1390, %v1597
        %v1599 = vpop.f32.mrb[0].mxu0
        %1600 = vmatprep.mubr.f32.mxu0 0.0
        %v1601 = vand.u32 %v685, 4294901760
        %v1602 = vsub.f32 %v685, %v1601
        %v1603 = vand.u32 %v1602, 4294901760
        %1604 = vmatmul.mubr.f32.gmra.mrb[0].mxu0 %v1603
        %v1605 = vpop.f32.mrb[0].mxu0
        %v1606 = vadd.f32 %v1397, %v1605
        %v1607 = vpop.f32.mrb[0].mxu0
        %1608 = vdwg.mxu0
        %1609 = vmatprep.subr.mxu0 0.0
        %v1610 = vand.u32 %v686, 4294901760
        %v1611 = vsub.f32 %v686, %v1610
        %v1612 = vand.u32 %v1611, 4294901760
        %1613 = vmatpush1.msra.mxu0 %v1612
        %1614 = vmatprep.subr.mxu0 0.0
        %v1615 = vand.u32 %v687, 4294901760
        %v1616 = vsub.f32 %v687, %v1615
        %v1617 = vand.u32 %v1616, 4294901760
        %1618 = vmatpush1.msra.mxu0 %v1617
        %1619 = vmatprep.subr.mxu0 0.0
        %v1620 = vand.u32 %v688, 4294901760
        %v1621 = vsub.f32 %v688, %v1620
        %v1622 = vand.u32 %v1621, 4294901760
        %1623 = vmatpush1.msra.mxu0 %v1622
        %1624 = vmatprep.subr.mxu0 0.0
        %v1625 = vand.u32 %v689, 4294901760
        %v1626 = vsub.f32 %v689, %v1625
        %v1627 = vand.u32 %v1626, 4294901760
        %1628 = vmatpush1.msra.mxu0 %v1627
        %1629 = vmatprep.subr.mxu0 0.0
        %v1630 = vand.u32 %v690, 4294901760
        %v1631 = vsub.f32 %v690, %v1630
        %v1632 = vand.u32 %v1631, 4294901760
        %1633 = vmatpush1.msra.mxu0 %v1632
        %1634 = vmatprep.subr.mxu0 0.0
        %v1635 = vand.u32 %v691, 4294901760
        %v1636 = vsub.f32 %v691, %v1635
        %v1637 = vand.u32 %v1636, 4294901760
        %1638 = vmatpush1.msra.mxu0 %v1637
        %1639 = vmatprep.subr.mxu0 0.0
        %v1640 = vand.u32 %v692, 4294901760
        %v1641 = vsub.f32 %v692, %v1640
        %v1642 = vand.u32 %v1641, 4294901760
        %1643 = vmatpush1.msra.mxu0 %v1642
        %1644 = vmatprep.subr.mxu0 0.0
        %v1645 = vand.u32 %v693, 4294901760
        %v1646 = vsub.f32 %v693, %v1645
        %v1647 = vand.u32 %v1646, 4294901760
        %1648 = vmatpush1.msra.mxu0 %v1647
        %1649 = vmatprep.subr.mxu0 0.0
        %v1650 = vand.u32 %v694, 4294901760
        %v1651 = vsub.f32 %v694, %v1650
        %v1652 = vand.u32 %v1651, 4294901760
        %1653 = vmatpush1.msra.mxu0 %v1652
        %1654 = vmatprep.subr.mxu0 0.0
        %v1655 = vand.u32 %v695, 4294901760
        %v1656 = vsub.f32 %v695, %v1655
        %v1657 = vand.u32 %v1656, 4294901760
        %1658 = vmatpush1.msra.mxu0 %v1657
        %1659 = vmatprep.subr.mxu0 0.0
        %v1660 = vand.u32 %v696, 4294901760
        %v1661 = vsub.f32 %v696, %v1660
        %v1662 = vand.u32 %v1661, 4294901760
        %1663 = vmatpush1.msra.mxu0 %v1662
        %1664 = vmatprep.subr.mxu0 0.0
        %v1665 = vand.u32 %v697, 4294901760
        %v1666 = vsub.f32 %v697, %v1665
        %v1667 = vand.u32 %v1666, 4294901760
        %1668 = vmatpush1.msra.mxu0 %v1667
        %1669 = vmatprep.subr.mxu0 0.0
        %v1670 = vand.u32 %v698, 4294901760
        %v1671 = vsub.f32 %v698, %v1670
        %v1672 = vand.u32 %v1671, 4294901760
        %1673 = vmatpush1.msra.mxu0 %v1672
        %1674 = vmatprep.subr.mxu0 0.0
        %v1675 = vand.u32 %v699, 4294901760
        %v1676 = vsub.f32 %v699, %v1675
        %v1677 = vand.u32 %v1676, 4294901760
        %1678 = vmatpush1.msra.mxu0 %v1677
        %1679 = vmatprep.subr.mxu0 0.0
        %v1680 = vand.u32 %v700, 4294901760
        %v1681 = vsub.f32 %v700, %v1680
        %v1682 = vand.u32 %v1681, 4294901760
        %1683 = vmatpush1.msra.mxu0 %v1682
        %1684 = vmatprep.subr.mxu0 0.0
        %v1685 = vand.u32 %v701, 4294901760
        %v1686 = vsub.f32 %v701, %v1685
        %v1687 = vand.u32 %v1686, 4294901760
        %1688 = vmatpush1.msra.mxu0 %v1687
        %1689 = vmatprep.subr.mxu0 0.0
        %1690 = vmatpush1.msra.mxu0 0.0
        %1691 = vmatprep.subr.mxu0 0.0
        %1692 = vmatpush1.msra.mxu0 0.0
        %1693 = vmatprep.subr.mxu0 0.0
        %1694 = vmatpush1.msra.mxu0 0.0
        %1695 = vmatprep.subr.mxu0 0.0
        %1696 = vmatpush1.msra.mxu0 0.0
        %1697 = vmatprep.subr.mxu0 0.0
        %1698 = vmatpush1.msra.mxu0 0.0
        %1699 = vmatprep.subr.mxu0 0.0
        %1700 = vmatpush1.msra.mxu0 0.0
        %1701 = vmatprep.subr.mxu0 0.0
        %1702 = vmatpush1.msra.mxu0 0.0
        %1703 = vmatprep.subr.mxu0 0.0
        %1704 = vmatpush1.msra.mxu0 0.0
        %1705 = vmatprep.subr.mxu0 0.0
        %1706 = vmatpush1.msra.mxu0 0.0
        %1707 = vmatprep.subr.mxu0 0.0
        %1708 = vmatpush1.msra.mxu0 0.0
        %1709 = vmatprep.subr.mxu0 0.0
        %1710 = vmatpush1.msra.mxu0 0.0
        %1711 = vmatprep.subr.mxu0 0.0
        %1712 = vmatpush1.msra.mxu0 0.0
        %1713 = vmatprep.subr.mxu0 0.0
        %1714 = vmatpush1.msra.mxu0 0.0
        %1715 = vmatprep.subr.mxu0 0.0
        %1716 = vmatpush1.msra.mxu0 0.0
        %1717 = vmatprep.subr.mxu0 0.0
        %1718 = vmatpush1.msra.mxu0 0.0
        %1719 = vmatprep.subr.mxu0 0.0
        %1720 = vmatpush1.msra.mxu0 0.0
        %1721 = vmatprep.mubr.f32.mxu0 0.0
        %v1722 = vand.u32 %v670, 4294901760
        %1723 = vmatmul.mubr.f32.gmra.mrb[0].mxu0 %v1722
        %v1724 = vpop.f32.mrb[0].mxu0
        %v1725 = vadd.f32 %v1486, %v1724
        %v1726 = vpop.f32.mrb[0].mxu0
        %1727 = vmatprep.mubr.f32.mxu0 0.0
        %v1728 = vand.u32 %v671, 4294901760
        %1729 = vmatmul.mubr.f32.gmra.mrb[0].mxu0 %v1728
        %v1730 = vpop.f32.mrb[0].mxu0
        %v1731 = vadd.f32 %v1494, %v1730
        %v1732 = vpop.f32.mrb[0].mxu0
        %1733 = vmatprep.mubr.f32.mxu0 0.0
        %v1734 = vand.u32 %v672, 4294901760
        %1735 = vmatmul.mubr.f32.gmra.mrb[0].mxu0 %v1734
        %v1736 = vpop.f32.mrb[0].mxu0
        %v1737 = vadd.f32 %v1502, %v1736
        %v1738 = vpop.f32.mrb[0].mxu0
        %1739 = vmatprep.mubr.f32.mxu0 0.0
        %v1740 = vand.u32 %v673, 4294901760
        %1741 = vmatmul.mubr.f32.gmra.mrb[0].mxu0 %v1740
        %v1742 = vpop.f32.mrb[0].mxu0
        %v1743 = vadd.f32 %v1510, %v1742
        %v1744 = vpop.f32.mrb[0].mxu0
        %1745 = vmatprep.mubr.f32.mxu0 0.0
        %v1746 = vand.u32 %v674, 4294901760
        %1747 = vmatmul.mubr.f32.gmra.mrb[0].mxu0 %v1746
        %v1748 = vpop.f32.mrb[0].mxu0
        %v1749 = vadd.f32 %v1518, %v1748
        %v1750 = vpop.f32.mrb[0].mxu0
        %1751 = vmatprep.mubr.f32.mxu0 0.0
        %v1752 = vand.u32 %v675, 4294901760
        %1753 = vmatmul.mubr.f32.gmra.mrb[0].mxu0 %v1752
        %v1754 = vpop.f32.mrb[0].mxu0
        %v1755 = vadd.f32 %v1526, %v1754
        %v1756 = vpop.f32.mrb[0].mxu0
        %1757 = vmatprep.mubr.f32.mxu0 0.0
        %v1758 = vand.u32 %v676, 4294901760
        %1759 = vmatmul.mubr.f32.gmra.mrb[0].mxu0 %v1758
        %v1760 = vpop.f32.mrb[0].mxu0
        %v1761 = vadd.f32 %v1534, %v1760
        %v1762 = vpop.f32.mrb[0].mxu0
        %1763 = vmatprep.mubr.f32.mxu0 0.0
        %v1764 = vand.u32 %v677, 4294901760
        %1765 = vmatmul.mubr.f32.gmra.mrb[0].mxu0 %v1764
        %v1766 = vpop.f32.mrb[0].mxu0
        %v1767 = vadd.f32 %v1542, %v1766
        %v1768 = vpop.f32.mrb[0].mxu0
        %1769 = vmatprep.mubr.f32.mxu0 0.0
        %v1770 = vand.u32 %v678, 4294901760
        %1771 = vmatmul.mubr.f32.gmra.mrb[0].mxu0 %v1770
        %v1772 = vpop.f32.mrb[0].mxu0
        %v1773 = vadd.f32 %v1550, %v1772
        %v1774 = vpop.f32.mrb[0].mxu0
        %1775 = vmatprep.mubr.f32.mxu0 0.0
        %v1776 = vand.u32 %v679, 4294901760
        %1777 = vmatmul.mubr.f32.gmra.mrb[0].mxu0 %v1776
        %v1778 = vpop.f32.mrb[0].mxu0
        %v1779 = vadd.f32 %v1558, %v1778
        %v1780 = vpop.f32.mrb[0].mxu0
        %1781 = vmatprep.mubr.f32.mxu0 0.0
        %v1782 = vand.u32 %v680, 4294901760
        %1783 = vmatmul.mubr.f32.gmra.mrb[0].mxu0 %v1782
        %v1784 = vpop.f32.mrb[0].mxu0
        %v1785 = vadd.f32 %v1566, %v1784
        %v1786 = vpop.f32.mrb[0].mxu0
        %1787 = vmatprep.mubr.f32.mxu0 0.0
        %v1788 = vand.u32 %v681, 4294901760
        %1789 = vmatmul.mubr.f32.gmra.mrb[0].mxu0 %v1788
        %v1790 = vpop.f32.mrb[0].mxu0
        %v1791 = vadd.f32 %v1574, %v1790
        %v1792 = vpop.f32.mrb[0].mxu0
        %1793 = vmatprep.mubr.f32.mxu0 0.0
        %v1794 = vand.u32 %v682, 4294901760
        %1795 = vmatmul.mubr.f32.gmra.mrb[0].mxu0 %v1794
        %v1796 = vpop.f32.mrb[0].mxu0
        %v1797 = vadd.f32 %v1582, %v1796
        %v1798 = vpop.f32.mrb[0].mxu0
        %1799 = vmatprep.mubr.f32.mxu0 0.0
        %v1800 = vand.u32 %v683, 4294901760
        %1801 = vmatmul.mubr.f32.gmra.mrb[0].mxu0 %v1800
        %v1802 = vpop.f32.mrb[0].mxu0
        %v1803 = vadd.f32 %v1590, %v1802
        %v1804 = vpop.f32.mrb[0].mxu0
        %1805 = vmatprep.mubr.f32.mxu0 0.0
        %v1806 = vand.u32 %v684, 4294901760
        %1807 = vmatmul.mubr.f32.gmra.mrb[0].mxu0 %v1806
        %v1808 = vpop.f32.mrb[0].mxu0
        %v1809 = vadd.f32 %v1598, %v1808
        %v1810 = vpop.f32.mrb[0].mxu0
        %1811 = vmatprep.mubr.f32.mxu0 0.0
        %v1812 = vand.u32 %v685, 4294901760
        %1813 = vmatmul.mubr.f32.gmra.mrb[0].mxu0 %v1812
        %v1814 = vpop.f32.mrb[0].mxu0
        %v1815 = vadd.f32 %v1606, %v1814
        %v1816 = vpop.f32.mrb[0].mxu0
        %1817 = vdwg.mxu0
        %1818 = vmatprep.subr.mxu0 0.0
        %v1819 = vand.u32 %v686, 4294901760
        %1820 = vmatpush1.msra.mxu0 %v1819
        %1821 = vmatprep.subr.mxu0 0.0
        %v1822 = vand.u32 %v687, 4294901760
        %1823 = vmatpush1.msra.mxu0 %v1822
        %1824 = vmatprep.subr.mxu0 0.0
        %v1825 = vand.u32 %v688, 4294901760
        %1826 = vmatpush1.msra.mxu0 %v1825
        %1827 = vmatprep.subr.mxu0 0.0
        %v1828 = vand.u32 %v689, 4294901760
        %1829 = vmatpush1.msra.mxu0 %v1828
        %1830 = vmatprep.subr.mxu0 0.0
        %v1831 = vand.u32 %v690, 4294901760
        %1832 = vmatpush1.msra.mxu0 %v1831
        %1833 = vmatprep.subr.mxu0 0.0
        %v1834 = vand.u32 %v691, 4294901760
        %1835 = vmatpush1.msra.mxu0 %v1834
        %1836 = vmatprep.subr.mxu0 0.0
        %v1837 = vand.u32 %v692, 4294901760
        %1838 = vmatpush1.msra.mxu0 %v1837
        %1839 = vmatprep.subr.mxu0 0.0
        %v1840 = vand.u32 %v693, 4294901760
        %1841 = vmatpush1.msra.mxu0 %v1840
        %1842 = vmatprep.subr.mxu0 0.0
        %v1843 = vand.u32 %v694, 4294901760
        %1844 = vmatpush1.msra.mxu0 %v1843
        %1845 = vmatprep.subr.mxu0 0.0
        %v1846 = vand.u32 %v695, 4294901760
        %1847 = vmatpush1.msra.mxu0 %v1846
        %1848 = vmatprep.subr.mxu0 0.0
        %v1849 = vand.u32 %v696, 4294901760
        %1850 = vmatpush1.msra.mxu0 %v1849
        %1851 = vmatprep.subr.mxu0 0.0
        %v1852 = vand.u32 %v697, 4294901760
        %1853 = vmatpush1.msra.mxu0 %v1852
        %1854 = vmatprep.subr.mxu0 0.0
        %v1855 = vand.u32 %v698, 4294901760
        %1856 = vmatpush1.msra.mxu0 %v1855
        %1857 = vmatprep.subr.mxu0 0.0
        %v1858 = vand.u32 %v699, 4294901760
        %1859 = vmatpush1.msra.mxu0 %v1858
        %1860 = vmatprep.subr.mxu0 0.0
        %v1861 = vand.u32 %v700, 4294901760
        %1862 = vmatpush1.msra.mxu0 %v1861
        %1863 = vmatprep.subr.mxu0 0.0
        %v1864 = vand.u32 %v701, 4294901760
        %1865 = vmatpush1.msra.mxu0 %v1864
        %1866 = vmatprep.subr.mxu0 0.0
        %1867 = vmatpush1.msra.mxu0 0.0
        %1868 = vmatprep.subr.mxu0 0.0
        %1869 = vmatpush1.msra.mxu0 0.0
        %1870 = vmatprep.subr.mxu0 0.0
        %1871 = vmatpush1.msra.mxu0 0.0
        %1872 = vmatprep.subr.mxu0 0.0
        %1873 = vmatpush1.msra.mxu0 0.0
        %1874 = vmatprep.subr.mxu0 0.0
        %1875 = vmatpush1.msra.mxu0 0.0
        %1876 = vmatprep.subr.mxu0 0.0
        %1877 = vmatpush1.msra.mxu0 0.0
        %1878 = vmatprep.subr.mxu0 0.0
        %1879 = vmatpush1.msra.mxu0 0.0
        %1880 = vmatprep.subr.mxu0 0.0
        %1881 = vmatpush1.msra.mxu0 0.0
        %1882 = vmatprep.subr.mxu0 0.0
        %1883 = vmatpush1.msra.mxu0 0.0
        %1884 = vmatprep.subr.mxu0 0.0
        %1885 = vmatpush1.msra.mxu0 0.0
        %1886 = vmatprep.subr.mxu0 0.0
        %1887 = vmatpush1.msra.mxu0 0.0
        %1888 = vmatprep.subr.mxu0 0.0
        %1889 = vmatpush1.msra.mxu0 0.0
        %1890 = vmatprep.subr.mxu0 0.0
        %1891 = vmatpush1.msra.mxu0 0.0
        %1892 = vmatprep.subr.mxu0 0.0
        %1893 = vmatpush1.msra.mxu0 0.0
        %1894 = vmatprep.subr.mxu0 0.0
        %1895 = vmatpush1.msra.mxu0 0.0
        %1896 = vmatprep.subr.mxu0 0.0
        %1897 = vmatpush1.msra.mxu0 0.0
        %1898 = vmatprep.mubr.f32.mxu0 0.0
        %v1899 = vand.u32 %v670, 4294901760
        %1900 = vmatmul.mubr.f32.gmra.mrb[0].mxu0 %v1899
        %v1901 = vpop.f32.mrb[0].mxu0
        %v1902 = vadd.f32 %v1725, %v1901
        %v1903 = vpop.f32.mrb[0].mxu0
        %1904 = vmatprep.mubr.f32.mxu0 0.0
        %v1905 = vand.u32 %v671, 4294901760
        %1906 = vmatmul.mubr.f32.gmra.mrb[0].mxu0 %v1905
        %v1907 = vpop.f32.mrb[0].mxu0
        %v1908 = vadd.f32 %v1731, %v1907
        %v1909 = vpop.f32.mrb[0].mxu0
        %1910 = vmatprep.mubr.f32.mxu0 0.0
        %v1911 = vand.u32 %v672, 4294901760
        %1912 = vmatmul.mubr.f32.gmra.mrb[0].mxu0 %v1911
        %v1913 = vpop.f32.mrb[0].mxu0
        %v1914 = vadd.f32 %v1737, %v1913
        %v1915 = vpop.f32.mrb[0].mxu0
        %1916 = vmatprep.mubr.f32.mxu0 0.0
        %v1917 = vand.u32 %v673, 4294901760
        %1918 = vmatmul.mubr.f32.gmra.mrb[0].mxu0 %v1917
        %v1919 = vpop.f32.mrb[0].mxu0
        %v1920 = vadd.f32 %v1743, %v1919
        %v1921 = vpop.f32.mrb[0].mxu0
        %1922 = vmatprep.mubr.f32.mxu0 0.0
        %v1923 = vand.u32 %v674, 4294901760
        %1924 = vmatmul.mubr.f32.gmra.mrb[0].mxu0 %v1923
        %v1925 = vpop.f32.mrb[0].mxu0
        %v1926 = vadd.f32 %v1749, %v1925
        %v1927 = vpop.f32.mrb[0].mxu0
        %1928 = vmatprep.mubr.f32.mxu0 0.0
        %v1929 = vand.u32 %v675, 4294901760
        %1930 = vmatmul.mubr.f32.gmra.mrb[0].mxu0 %v1929
        %v1931 = vpop.f32.mrb[0].mxu0
        %v1932 = vadd.f32 %v1755, %v1931
        %v1933 = vpop.f32.mrb[0].mxu0
        %1934 = vmatprep.mubr.f32.mxu0 0.0
        %v1935 = vand.u32 %v676, 4294901760
        %1936 = vmatmul.mubr.f32.gmra.mrb[0].mxu0 %v1935
        %v1937 = vpop.f32.mrb[0].mxu0
        %v1938 = vadd.f32 %v1761, %v1937
        %v1939 = vpop.f32.mrb[0].mxu0
        %1940 = vmatprep.mubr.f32.mxu0 0.0
        %v1941 = vand.u32 %v677, 4294901760
        %1942 = vmatmul.mubr.f32.gmra.mrb[0].mxu0 %v1941
        %v1943 = vpop.f32.mrb[0].mxu0
        %v1944 = vadd.f32 %v1767, %v1943
        %v1945 = vpop.f32.mrb[0].mxu0
        %1946 = vmatprep.mubr.f32.mxu0 0.0
        %v1947 = vand.u32 %v678, 4294901760
        %1948 = vmatmul.mubr.f32.gmra.mrb[0].mxu0 %v1947
        %v1949 = vpop.f32.mrb[0].mxu0
        %v1950 = vadd.f32 %v1773, %v1949
        %v1951 = vpop.f32.mrb[0].mxu0
        %1952 = vmatprep.mubr.f32.mxu0 0.0
        %v1953 = vand.u32 %v679, 4294901760
        %1954 = vmatmul.mubr.f32.gmra.mrb[0].mxu0 %v1953
        %v1955 = vpop.f32.mrb[0].mxu0
        %v1956 = vadd.f32 %v1779, %v1955
        %v1957 = vpop.f32.mrb[0].mxu0
        %1958 = vmatprep.mubr.f32.mxu0 0.0
        %v1959 = vand.u32 %v680, 4294901760
        %1960 = vmatmul.mubr.f32.gmra.mrb[0].mxu0 %v1959
        %v1961 = vpop.f32.mrb[0].mxu0
        %v1962 = vadd.f32 %v1785, %v1961
        %v1963 = vpop.f32.mrb[0].mxu0
        %1964 = vmatprep.mubr.f32.mxu0 0.0
        %v1965 = vand.u32 %v681, 4294901760
        %1966 = vmatmul.mubr.f32.gmra.mrb[0].mxu0 %v1965
        %v1967 = vpop.f32.mrb[0].mxu0
        %v1968 = vadd.f32 %v1791, %v1967
        %v1969 = vpop.f32.mrb[0].mxu0
        %1970 = vmatprep.mubr.f32.mxu0 0.0
        %v1971 = vand.u32 %v682, 4294901760
        %1972 = vmatmul.mubr.f32.gmra.mrb[0].mxu0 %v1971
        %v1973 = vpop.f32.mrb[0].mxu0
        %v1974 = vadd.f32 %v1797, %v1973
        %v1975 = vpop.f32.mrb[0].mxu0
        %1976 = vmatprep.mubr.f32.mxu0 0.0
        %v1977 = vand.u32 %v683, 4294901760
        %1978 = vmatmul.mubr.f32.gmra.mrb[0].mxu0 %v1977
        %v1979 = vpop.f32.mrb[0].mxu0
        %v1980 = vadd.f32 %v1803, %v1979
        %v1981 = vpop.f32.mrb[0].mxu0
        %1982 = vmatprep.mubr.f32.mxu0 0.0
        %v1983 = vand.u32 %v684, 4294901760
        %1984 = vmatmul.mubr.f32.gmra.mrb[0].mxu0 %v1983
        %v1985 = vpop.f32.mrb[0].mxu0
        %v1986 = vadd.f32 %v1809, %v1985
        %v1987 = vpop.f32.mrb[0].mxu0
        %1988 = vmatprep.mubr.f32.mxu0 0.0
        %v1989 = vand.u32 %v685, 4294901760
        %1990 = vmatmul.mubr.f32.gmra.mrb[0].mxu0 %v1989
        %v1991 = vpop.f32.mrb[0].mxu0
        %v1992 = vadd.f32 %v1815, %v1991
        %v1993 = vpop.f32.mrb[0].mxu0
        %1994 = vdwg.mxu0
        %v1995 = vmax.f32 %v1902, -1.0
        %v1996 = vmax.f32 %v1908, -1.0
        %v1997 = vmax.f32 %v1914, -1.0
        %v1998 = vmax.f32 %v1920, -1.0
        %v1999 = vmax.f32 %v1926, -1.0
        %v2000 = vmax.f32 %v1932, -1.0
        %v2001 = vmax.f32 %v1938, -1.0
        %v2002 = vmax.f32 %v1944, -1.0
        %v2003 = vmax.f32 %v1950, -1.0
        %v2004 = vmax.f32 %v1956, -1.0
        %v2005 = vmax.f32 %v1962, -1.0
        %v2006 = vmax.f32 %v1968, -1.0
        %v2007 = vmax.f32 %v1974, -1.0
        %v2008 = vmax.f32 %v1980, -1.0
        %v2009 = vmax.f32 %v1986, -1.0
        %v2010 = vmax.f32 %v1992, -1.0
        %v2011 = vmin.f32 %v1995, 1.0
        %v2012 = vmin.f32 %v1996, 1.0
        %v2013 = vmin.f32 %v1997, 1.0
        %v2014 = vmin.f32 %v1998, 1.0
        %v2015 = vmin.f32 %v1999, 1.0
        %v2016 = vmin.f32 %v2000, 1.0
        %v2017 = vmin.f32 %v2001, 1.0
        %v2018 = vmin.f32 %v2002, 1.0
        %v2019 = vmin.f32 %v2003, 1.0
        %v2020 = vmin.f32 %v2004, 1.0
        %v2021 = vmin.f32 %v2005, 1.0
        %v2022 = vmin.f32 %v2006, 1.0
        %v2023 = vmin.f32 %v2007, 1.0
        %v2024 = vmin.f32 %v2008, 1.0
        %v2025 = vmin.f32 %v2009, 1.0
        %v2026 = vmin.f32 %v2010, 1.0
        %2027 = vmax.xlane.f32.xlu0 %v2011
        %v2028 = vpop.xlane.xlu0 %2027
        %2029 = vmax.xlane.f32.xlu0 %v2012
        %v2030 = vpop.xlane.xlu0 %2029
        %2031 = vmax.xlane.f32.xlu0 %v2013
        %v2032 = vpop.xlane.xlu0 %2031
        %2033 = vmax.xlane.f32.xlu0 %v2014
        %v2034 = vpop.xlane.xlu0 %2033
        %2035 = vmax.xlane.f32.xlu0 %v2015
        %v2036 = vpop.xlane.xlu0 %2035
        %2037 = vmax.xlane.f32.xlu0 %v2016
        %v2038 = vpop.xlane.xlu0 %2037
        %2039 = vmax.xlane.f32.xlu0 %v2017
        %v2040 = vpop.xlane.xlu0 %2039
        %2041 = vmax.xlane.f32.xlu0 %v2018
        %v2042 = vpop.xlane.xlu0 %2041
        %2043 = vmax.xlane.f32.xlu0 %v2019
        %v2044 = vpop.xlane.xlu0 %2043
        %2045 = vmax.xlane.f32.xlu0 %v2020
        %v2046 = vpop.xlane.xlu0 %2045
        %2047 = vmax.xlane.f32.xlu0 %v2021
        %v2048 = vpop.xlane.xlu0 %2047
        %2049 = vmax.xlane.f32.xlu0 %v2022
        %v2050 = vpop.xlane.xlu0 %2049
        %2051 = vmax.xlane.f32.xlu0 %v2023
        %v2052 = vpop.xlane.xlu0 %2051
        %2053 = vmax.xlane.f32.xlu0 %v2024
        %v2054 = vpop.xlane.xlu0 %2053
        %2055 = vmax.xlane.f32.xlu0 %v2025
        %v2056 = vpop.xlane.xlu0 %2055
        %2057 = vmax.xlane.f32.xlu0 %v2026
        %v2058 = vpop.xlane.xlu0 %2057
        %v2059 = vsub.f32 %v2011, %v2028
        %v2060 = vsub.f32 %v2012, %v2030
        %v2061 = vsub.f32 %v2013, %v2032
        %v2062 = vsub.f32 %v2014, %v2034
        %v2063 = vsub.f32 %v2015, %v2036
        %v2064 = vsub.f32 %v2016, %v2038
        %v2065 = vsub.f32 %v2017, %v2040
        %v2066 = vsub.f32 %v2018, %v2042
        %v2067 = vsub.f32 %v2019, %v2044
        %v2068 = vsub.f32 %v2020, %v2046
        %v2069 = vsub.f32 %v2021, %v2048
        %v2070 = vsub.f32 %v2022, %v2050
        %v2071 = vsub.f32 %v2023, %v2052
        %v2072 = vsub.f32 %v2024, %v2054
        %v2073 = vsub.f32 %v2025, %v2056
        %v2074 = vsub.f32 %v2026, %v2058
        %v2075 = vmul.f32 %v2059, 1.442695
        %v2076 = vpow.pop %v2075
        %v2077 = vmul.f32 %v2060, 1.442695
        %v2078 = vpow.pop %v2077
        %v2079 = vmul.f32 %v2061, 1.442695
        %v2080 = vpow.pop %v2079
        %v2081 = vmul.f32 %v2062, 1.442695
        %v2082 = vpow.pop %v2081
        %v2083 = vmul.f32 %v2063, 1.442695
        %v2084 = vpow.pop %v2083
        %v2085 = vmul.f32 %v2064, 1.442695
        %v2086 = vpow.pop %v2085
        %v2087 = vmul.f32 %v2065, 1.442695
        %v2088 = vpow.pop %v2087
        %v2089 = vmul.f32 %v2066, 1.442695
        %v2090 = vpow.pop %v2089
        %v2091 = vmul.f32 %v2067, 1.442695
        %v2092 = vpow.pop %v2091
        %v2093 = vmul.f32 %v2068, 1.442695
        %v2094 = vpow.pop %v2093
        %v2095 = vmul.f32 %v2069, 1.442695
        %v2096 = vpow.pop %v2095
        %v2097 = vmul.f32 %v2070, 1.442695
        %v2098 = vpow.pop %v2097
        %v2099 = vmul.f32 %v2071, 1.442695
        %v2100 = vpow.pop %v2099
        %v2101 = vmul.f32 %v2072, 1.442695
        %v2102 = vpow.pop %v2101
        %v2103 = vmul.f32 %v2073, 1.442695
        %v2104 = vpow.pop %v2103
        %v2105 = vmul.f32 %v2074, 1.442695
        %v2106 = vpow.pop %v2105
        %2107 = vadd.xlane.f32.xlu0 %v2076
        %v2108 = vpop.xlane.xlu0 %2107
        %2109 = vadd.xlane.f32.xlu0 %v2078
        %v2110 = vpop.xlane.xlu0 %2109
        %2111 = vadd.xlane.f32.xlu0 %v2080
        %v2112 = vpop.xlane.xlu0 %2111
        %2113 = vadd.xlane.f32.xlu0 %v2082
        %v2114 = vpop.xlane.xlu0 %2113
        %2115 = vadd.xlane.f32.xlu0 %v2084
        %v2116 = vpop.xlane.xlu0 %2115
        %2117 = vadd.xlane.f32.xlu0 %v2086
        %v2118 = vpop.xlane.xlu0 %2117
        %2119 = vadd.xlane.f32.xlu0 %v2088
        %v2120 = vpop.xlane.xlu0 %2119
        %2121 = vadd.xlane.f32.xlu0 %v2090
        %v2122 = vpop.xlane.xlu0 %2121
        %2123 = vadd.xlane.f32.xlu0 %v2092
        %v2124 = vpop.xlane.xlu0 %2123
        %2125 = vadd.xlane.f32.xlu0 %v2094
        %v2126 = vpop.xlane.xlu0 %2125
        %2127 = vadd.xlane.f32.xlu0 %v2096
        %v2128 = vpop.xlane.xlu0 %2127
        %2129 = vadd.xlane.f32.xlu0 %v2098
        %v2130 = vpop.xlane.xlu0 %2129
        %2131 = vadd.xlane.f32.xlu0 %v2100
        %v2132 = vpop.xlane.xlu0 %2131
        %2133 = vadd.xlane.f32.xlu0 %v2102
        %v2134 = vpop.xlane.xlu0 %2133
        %2135 = vadd.xlane.f32.xlu0 %v2104
        %v2136 = vpop.xlane.xlu0 %2135
        %2137 = vadd.xlane.f32.xlu0 %v2106
        %v2138 = vpop.xlane.xlu0 %2137
        %v2139 = vlog2.pop %v2108
        %v2140 = vmul.f32 %v2139, 0.6931472
        %v2141 = vlog2.pop %v2110
        %v2142 = vmul.f32 %v2141, 0.6931472
        %v2143 = vlog2.pop %v2112
        %v2144 = vmul.f32 %v2143, 0.6931472
        %v2145 = vlog2.pop %v2114
        %v2146 = vmul.f32 %v2145, 0.6931472
        %v2147 = vlog2.pop %v2116
        %v2148 = vmul.f32 %v2147, 0.6931472
        %v2149 = vlog2.pop %v2118
        %v2150 = vmul.f32 %v2149, 0.6931472
        %v2151 = vlog2.pop %v2120
        %v2152 = vmul.f32 %v2151, 0.6931472
        %v2153 = vlog2.pop %v2122
        %v2154 = vmul.f32 %v2153, 0.6931472
        %v2155 = vlog2.pop %v2124
        %v2156 = vmul.f32 %v2155, 0.6931472
        %v2157 = vlog2.pop %v2126
        %v2158 = vmul.f32 %v2157, 0.6931472
        %v2159 = vlog2.pop %v2128
        %v2160 = vmul.f32 %v2159, 0.6931472
        %v2161 = vlog2.pop %v2130
        %v2162 = vmul.f32 %v2161, 0.6931472
        %v2163 = vlog2.pop %v2132
        %v2164 = vmul.f32 %v2163, 0.6931472
        %v2165 = vlog2.pop %v2134
        %v2166 = vmul.f32 %v2165, 0.6931472
        %v2167 = vlog2.pop %v2136
        %v2168 = vmul.f32 %v2167, 0.6931472
        %v2169 = vlog2.pop %v2138
        %v2170 = vmul.f32 %v2169, 0.6931472
        %v2171 = vsub.f32 %v2059, %v2140
        %v2172 = vsub.f32 %v2060, %v2142
        %v2173 = vsub.f32 %v2061, %v2144
        %v2174 = vsub.f32 %v2062, %v2146
        %v2175 = vsub.f32 %v2063, %v2148
        %v2176 = vsub.f32 %v2064, %v2150
        %v2177 = vsub.f32 %v2065, %v2152
        %v2178 = vsub.f32 %v2066, %v2154
        %v2179 = vsub.f32 %v2067, %v2156
        %v2180 = vsub.f32 %v2068, %v2158
        %v2181 = vsub.f32 %v2069, %v2160
        %v2182 = vsub.f32 %v2070, %v2162
        %v2183 = vsub.f32 %v2071, %v2164
        %v2184 = vsub.f32 %v2072, %v2166
        %v2185 = vsub.f32 %v2073, %v2168
        %v2186 = vsub.f32 %v2074, %v2170
        %2187 = vst [vmem:[%s164] sm:$0xff] %v2171
        %2188 = vst [vmem:[%s164 + $0x8] sm:$0xff] %v2172
        %2189 = vst [vmem:[%s164 + $0x10] sm:$0xff] %v2173
        %2190 = vst [vmem:[%s164 + $0x18] sm:$0xff] %v2174
        %2191 = vst [vmem:[%s164 + $0x20] sm:$0xff] %v2175
        %2192 = vst [vmem:[%s164 + $0x28] sm:$0xff] %v2176
        %2193 = vst [vmem:[%s164 + $0x30] sm:$0xff] %v2177
        %2194 = vst [vmem:[%s164 + $0x38] sm:$0xff] %v2178
        %2195 = vst [vmem:[%s164 + $0x40] sm:$0xff] %v2179
        %2196 = vst [vmem:[%s164 + $0x48] sm:$0xff] %v2180
        %2197 = vst [vmem:[%s164 + $0x50] sm:$0xff] %v2181
        %2198 = vst [vmem:[%s164 + $0x58] sm:$0xff] %v2182
        %2199 = vst [vmem:[%s164 + $0x60] sm:$0xff] %v2183
        %2200 = vst [vmem:[%s164 + $0x68] sm:$0xff] %v2184
        %2201 = vst [vmem:[%s164 + $0x70] sm:$0xff] %v2185
        %2202 = vst [vmem:[%s164 + $0x78] sm:$0xff] %v2186
        %s2203 = sand.u32 %s93, 1
        %s2204 = scalar_lea.sflag [#allocation3], %s2203
        %s2205 = sand.u32 %s93, 1
        %s2206 = smul.addr %s2205, 128
        %s2207 = scalar_lea.vmem [#allocation2], %s2206
        // Predicated region
        $region33: #{tpu_custom_call.1} parent=31 // pred_check
          %p2208 = pneg %p103
        $region34: #{tpu_custom_call.1} parent=31 // pred_check_branch
          %2210 = sbr.rel (%p2208) target = $region36
        $region35: #{tpu_custom_call.1} parent=31 // pred_region
          %s2211 = smul.u32 16, %s17
          %s2213 = ssub.s32 2048, 2048
          %2214 = vsyncadd %s2204, %s2213
          %s2215 = smul.addr %s2211, 128
          %s2216 = scalar_lea.hbm %s3, %s2215
          %s2217 = sshll.u32 %s2207, 4
          %s2218 = int_to_ptr.vmem [resolvable:$true] %s2217
          %2223 = dma.vmem_to_hbm [thread:$0]  %s2218, 2048, %s2216, %s2204, 128, 128, 8
        $region36: #{tpu_custom_call.1} parent=31 // pred_fallthru
          _
      $region32: #{tpu_custom_call.1} parent=5 // pred_fallthru
        _
      %p2224 = scmp.le.s32.totalorder 2, %s12
      // Predicated region
      $region37: #{tpu_custom_call.1} parent=5 // pred_check
        %p2225 = pneg %p2224
      $region38: #{tpu_custom_call.1} parent=5 // pred_check_branch
        %2227 = sbr.rel (%p2225) target = $region40
      $region39: #{tpu_custom_call.1} parent=5 // pred_region
        %s2228 = ssub.s32 %s12, 2
        // Predicated region
        $region41: #{tpu_custom_call.1} parent=39 // pred_check
          %p2229 = pneg %p109
        $region42: #{tpu_custom_call.1} parent=39 // pred_check_branch
          %2231 = sbr.rel (%p2229) target = $region44
        $region43: #{tpu_custom_call.1} parent=39 // pred_region
          %s2232 = sand.u32 %s94, 1
          %s2233 = scalar_lea.sflag [#allocation3], %s2232
          %s2234 = sand.u32 %s94, 1
          %s2235 = smul.addr %s2234, 128
          %s2236 = scalar_lea.vmem [#allocation2], %s2235
          %2237 = dma.done %s2233, 2048
        $region44: #{tpu_custom_call.1} parent=39 // pred_fallthru
          _
      $region40: #{tpu_custom_call.1} parent=5 // pred_fallthru
        _
    $region6: #{tpu_custom_call.1} parent=1 // loop_footer
      %s16 = sadd.s32 1, %s12
    $region7: #{tpu_custom_call.1} parent=1 // loop_footer_branch
      %11 = sbr.rel target = $region3
    $region8: #{tpu_custom_call.1} parent=1 // loop_exit
      _
    %2238 = vsyncpa [#allocation3], 1
    %s2239 = scalar_lea.sflag [#allocation3], 1
    %2240 = vsyncpa %s2239, 1

</llo_original>
